<compile_context>
chip_gen: v6e
topology: v6e:2x2x1
jax: 0.10.0
libtpu: 0.0.40
codegen_flags: <defaults>
</compile_context>

<pallas_src>
import functools

import jax
import jax.numpy as jnp
from jax.experimental import pallas as pl
from jax.experimental.pallas import tpu as pltpu

_PACK = 64    # lane width of the zero-padded fold-projection weight slabs
_OUT_C = 8    # packed output channels: fold1 in lanes 0:3, fold2 in lanes 4:7


# ----------------------------------------------------------------------------
# Pallas kernel: one (point tile, batch row) block per grid step.
# ----------------------------------------------------------------------------
def _folding_kernel(fp_ref, gp1_ref,
                    w2_ref, b2_ref, w3_ref, b3_ref,
                    w4f_ref,
                    w5_ref, b5_ref, w6_ref, b6_ref,
                    out_ref, *, compute_dtype):
    f32 = jnp.float32
    cd = compute_dtype

    fpv = fp_ref[0]                       # (2, H) f32  (batch-only projections)
    fp1 = fpv[0:1, :].astype(cd)          # (1, H) -> bf16 for the bf16 layer-1
    fp2 = fpv[1:2, :]                     # (1, H) f32 for the f32 K=3 chain

    # ---- mlp_conv1 ----
    # layer 1: both projections hoisted -> bf16 broadcast add + ReLU (VPU).
    h = jnp.maximum(fp1 + gp1_ref[...], 0)                            # (T, H) cd
    # layer 2: 512x512 on the MXU (bf16 in, f32 acc); bias -> ReLU -> one cast.
    h = jnp.dot(h, w2_ref[...], preferred_element_type=f32)
    h = jnp.maximum(h + b2_ref[...], 0.0).astype(cd)
    # layer 3: 512x64 slab, real fold1 in lanes 0:3 (rest exactly zero).
    f1 = jnp.dot(h, w3_ref[...], preferred_element_type=f32) + b3_ref[...]

    # ---- mlp_conv2 ----
    # layer 1: feature part hoisted; fold1 part is a K=3 f32 VPU outer product.
    g = fp2 + f1[:, 0:1] * w4f_ref[0:1, :]
    g = g + f1[:, 1:2] * w4f_ref[1:2, :]
    g = g + f1[:, 2:3] * w4f_ref[2:3, :]
    h = jnp.maximum(g, 0.0).astype(cd)                                 # (T, H)
    h = jnp.dot(h, w5_ref[...], preferred_element_type=f32)
    h = jnp.maximum(h + b5_ref[...], 0.0).astype(cd)
    # layer 3: 512x64 slab, real fold2 in lanes 4:7 (rest exactly zero).
    f2 = jnp.dot(h, w6_ref[...], preferred_element_type=f32) + b6_ref[...]

    # Padding lanes of f1/f2 are exact zeros, so one add packs
    # [fold1 | fold2] into lanes 0:8; only 8 channels are stored per point.
    out_ref[0] = (f1 + f2)[:, :_OUT_C].astype(out_ref.dtype)


# ----------------------------------------------------------------------------
# Wrapper: grid construction, hoisted projections, parameter packing, call.
# ----------------------------------------------------------------------------
def folding_net_ndim_forward(features, params, *, grid_size, dim=1,
                             grid_scale=0.2, tile_n=512,
                             compute_dtype=jnp.bfloat16):
    """FoldingNet_Ndim forward (inference).

    Note: BatchNorm1d is folded in inference mode (running statistics);
    training-mode batch statistics are not reproduced.
    """
    B, C = features.shape
    N = grid_size ** dim
    p = params
    H = p["w1a"].shape[1]                 # hidden width (512)

    # Unique folding-grid points, shared across the batch: (N, dim).
    lin = jnp.linspace(-grid_scale, grid_scale, grid_size, dtype=jnp.float32)
    if dim == 1:
        g = lin[:, None]
    elif dim == 2:
        gx, gy = jnp.meshgrid(lin, lin, indexing="ij")     # torch.meshgrid default
        g = jnp.stack([gx.reshape(-1), gy.reshape(-1)], axis=-1)
    else:
        raise ValueError("dim must be 1 or 2")

    # Hoisted layer-1 projections (tiny matmuls, plain JAX):
    #   [X | G] @ W1 == X @ W1[:C] + G @ W1[C:]
    # X-part depends only on the batch row, G-part only on the point.
    feat32 = features.astype(jnp.float32)
    fp = jnp.stack([feat32 @ p["w1a"] + p["b1"],
                    feat32 @ p["w4a"] + p["b4"]], axis=1)   # (B, 2, H) f32
    gp1 = (g @ p["w1g"]).astype(compute_dtype)              # (N, H)  bf16

    # Point-tile sizing: multiple of 8 sublanes, clamped for small N.
    tile = max(8, (min(tile_n, N) // 8) * 8)
    # Keep >= 2 grid steps when possible so both v7x TensorCores get work.
    if B == 1 and tile >= N and N >= 16:
        tile = max(8, (((N + 1) // 2) // 8) * 8)
    Np = pl.cdiv(N, tile) * tile
    if Np != N:
        gp1 = jnp.pad(gp1, ((0, Np - N), (0, 0)))

    # Pack weights.  Big matmul weights go to bf16 (MXU); the small fold
    # projections are zero-padded into disjoint lanes of a 64-lane slab so the
    # two folds combine with a single add; biases / K=3 weights stay f32.
    w2 = p["w2"].astype(compute_dtype)
    w5 = p["w5"].astype(compute_dtype)
    b2 = p["b2"].astype(jnp.float32)
    b5 = p["b5"].astype(jnp.float32)
    w3p = jnp.zeros((H, _PACK), jnp.float32).at[:, 0:3].set(p["w3"]).astype(compute_dtype)
    w6p = jnp.zeros((H, _PACK), jnp.float32).at[:, 4:7].set(p["w6"]).astype(compute_dtype)
    b3p = jnp.zeros((1, _PACK), jnp.float32).at[:, 0:3].set(p["b3"])
    b6p = jnp.zeros((1, _PACK), jnp.float32).at[:, 4:7].set(p["b6"])
    w4f = p["w4f"].astype(jnp.float32)                      # (3, 512)

    weights = (w2, b2, w3p, b3p, w4f, w5, b5, w6p, b6p)

    # Grid = (point tiles, batch).  The batch axis is innermost so gp1's block
    # index is constant across it (fetched once per tile, never re-DMA'd).
    fp_spec = pl.BlockSpec((1, 2, H), lambda t, b: (b, 0, 0))
    gp_spec = pl.BlockSpec((tile, H), lambda t, b: (t, 0))
    full_spec = lambda a: pl.BlockSpec(a.shape, lambda t, b: (0, 0))

    in_specs = [fp_spec, gp_spec] + [full_spec(w) for w in weights]
    out_specs = pl.BlockSpec((1, tile, _OUT_C), lambda t, b: (b, t, 0))
    out_shape = jax.ShapeDtypeStruct((B, Np, _OUT_C), jnp.float32)

    packed = pl.pallas_call(
        functools.partial(_folding_kernel, compute_dtype=compute_dtype),
        out_shape=out_shape,
        grid_spec=pltpu.PrefetchScalarGridSpec(
            num_scalar_prefetch=0,
            grid=(Np // tile, B),
            in_specs=in_specs,
            out_specs=out_specs,
        ),
        compiler_params=pltpu.CompilerParams(
            dimension_semantics=("parallel", "parallel"),
            vmem_limit_bytes=32 * 1024 * 1024),
    )(fp, gp1, *weights)

    fold1 = packed[:, :N, 0:3].astype(features.dtype)          # (B, N, 3)
    fold2 = packed[:, :N, 4:7].astype(features.dtype)          # (B, N, 3)
    return fold1, fold2


# ----------------------------------------------------------------------------
# Deterministic parameter construction (Conv1d k=1 + folded inference BN).
# ----------------------------------------------------------------------------
def _fold_bn(w_oc_ic, b_oc, gamma, beta, mean, var, eps=1e-5):
    """Fold inference-mode BN into a (out, in) conv weight; return (in, out)."""
    scale = gamma / jnp.sqrt(var + eps)
    w = (w_oc_ic * scale[:, None]).T            # (in, out)
    b = (b_oc - mean) * scale + beta
    return w.astype(jnp.float32), b[None, :].astype(jnp.float32)


def make_params(code_nfts, dim, hidden=(512, 512, 3), seed=0):
    C = code_nfts
    h1, h2, h3 = hidden
    key = jax.random.PRNGKey(seed)
    ks = jax.random.split(key, 16)

    def conv_w(k, out_c, in_c):
        return jax.random.normal(k, (out_c, in_c), jnp.float32) * 0.05

    def bn_p(k, c):
        k1, k2, k3 = jax.random.split(k, 3)
        gamma = 1.0 + 0.1 * jax.random.normal(k1, (c,), jnp.float32)
        beta = 0.1 * jax.random.normal(k2, (c,), jnp.float32)
        mean = 0.05 * jax.random.normal(k3, (c,), jnp.float32)
        var = jnp.ones((c,), jnp.float32)
        return gamma, beta, mean, var

    # ---- mlp_conv1: in = C + dim ----
    W1 = conv_w(ks[0], h1, C + dim); B1 = 0.01 * jax.random.normal(ks[1], (h1,))
    W2 = conv_w(ks[2], h2, h1);      B2 = 0.01 * jax.random.normal(ks[3], (h2,))
    W3 = conv_w(ks[4], h3, h2);      B3 = 0.01 * jax.random.normal(ks[5], (h3,))
    w1f, b1f = _fold_bn(W1, B1, *bn_p(ks[6], h1))
    w2f, b2f = _fold_bn(W2, B2, *bn_p(ks[7], h2))

    # ---- mlp_conv2: in = C + 3 ----
    W4 = conv_w(ks[8], h1, C + 3);   B4 = 0.01 * jax.random.normal(ks[9], (h1,))
    W5 = conv_w(ks[10], h2, h1);     B5 = 0.01 * jax.random.normal(ks[11], (h2,))
    W6 = conv_w(ks[12], h3, h2);     B6 = 0.01 * jax.random.normal(ks[13], (h3,))
    w4f_, b4f = _fold_bn(W4, B4, *bn_p(ks[14], h1))
    w5f, b5f = _fold_bn(W5, B5, *bn_p(ks[15], h2))

    return dict(
        # layer 1 of mlp_conv1, split into feature / grid channel blocks
        w1a=w1f[:C], w1g=w1f[C:], b1=b1f,
        w2=w2f, b2=b2f,
        w3=W3.T.astype(jnp.float32), b3=B3[None, :].astype(jnp.float32),
        # layer 1 of mlp_conv2, split into feature / fold1 channel blocks
        w4a=w4f_[:C], w4f=w4f_[C:], b4=b4f,
        w5=w5f, b5=b5f,
        w6=W6.T.astype(jnp.float32), b6=B6[None, :].astype(jnp.float32),
    )


# ----------------------------------------------------------------------------
# Pure-JAX reference.  compute_dtype=bf16 mirrors the kernel's dtype
# boundaries (tight check); compute_dtype=f32 is plain inference semantics.
# ----------------------------------------------------------------------------
def reference_forward(features, params, *, grid_size, dim, grid_scale=0.2,
                      compute_dtype=jnp.float32):
    B, C = features.shape
    N = grid_size ** dim
    lin = jnp.linspace(-grid_scale, grid_scale, grid_size, dtype=jnp.float32)
    if dim == 1:
        g = lin[:, None]
    else:
        gx, gy = jnp.meshgrid(lin, lin, indexing="ij")
        g = jnp.stack([gx.reshape(-1), gy.reshape(-1)], axis=-1)
    p = params
    cd = compute_dtype
    f32 = jnp.float32
    x = features.astype(f32)

    def dot_c(a, w):
        return jnp.dot(a.astype(cd), w.astype(cd), preferred_element_type=f32)

    # mlp_conv1 on cat([features, grid]) — split-matmul form, bf16 layer-1 add
    fp1 = (x @ p["w1a"] + p["b1"]).astype(cd)[:, None, :]          # (B,1,H)
    gp1 = (g @ p["w1g"]).astype(cd)[None, :, :]                    # (1,N,H)
    h = jnp.maximum(fp1 + gp1, 0)
    h = jnp.maximum(dot_c(h, p["w2"]) + p["b2"], 0.0)
    f1 = dot_c(h, p["w3"]) + p["b3"]                               # (B,N,3) f32

    # mlp_conv2 on cat([features, fold1]) — K=3 part as f32 broadcasts
    w4f = p["w4f"].astype(f32)
    h = (x @ p["w4a"] + p["b4"])[:, None, :]
    h = h + f1[..., 0:1] * w4f[0] + f1[..., 1:2] * w4f[1] + f1[..., 2:3] * w4f[2]
    h = jnp.maximum(h, 0.0)
    h = jnp.maximum(dot_c(h, p["w5"]) + p["b5"], 0.0)
    f2 = dot_c(h, p["w6"]) + p["b6"]
    return f1.astype(features.dtype), f2.astype(features.dtype)


if __name__ == "__main__":
    B, code_nfts = 2, 256
    key = jax.random.PRNGKey(0)
    features = jax.random.normal(key, (B, code_nfts), jnp.float32)

    for grid_size, dim in ((16, 1), (16, 2)):       # N = 16 and N = 256
        params = make_params(code_nfts, dim, hidden=(512, 512, 3), seed=0)

        fwd = jax.jit(functools.partial(
            folding_net_ndim_forward, grid_size=grid_size, dim=dim,
            tile_n=512, compute_dtype=jnp.bfloat16))
        fold1, fold2 = fwd(features, params)
        jax.block_until_ready((fold1, fold2))

        N = grid_size ** dim
        assert fold1.shape == (B, N, 3), fold1.shape
        assert fold2.shape == (B, N, 3), fold2.shape

        # Tight check vs. a reference that mirrors the bf16 boundaries.
        r1, r2 = reference_forward(features, params, grid_size=grid_size,
                                   dim=dim, compute_dtype=jnp.bfloat16)
        assert jnp.allclose(fold1, r1, atol=5e-3, rtol=5e-3)
        assert jnp.allclose(fold2, r2, atol=5e-3, rtol=5e-3)

        # Loose check vs. the full-f32 inference-mode semantics.
        r1f, r2f = reference_forward(features, params, grid_size=grid_size,
                                     dim=dim, compute_dtype=jnp.float32)
        assert jnp.allclose(fold1, r1f, atol=5e-2, rtol=5e-2)
        assert jnp.allclose(fold2, r2f, atol=5e-2, rtol=5e-2)

    print("KERNEL_OK")
</pallas_src>

<mosaic_0001>
module attributes {stable_mosaic.version = 11 : i64} {
  func.func @_folding_kernel(%arg0: i32, %arg1: i32, %arg2: memref<1x2x512xf32, #tpu.memory_space<vmem>>, %arg3: memref<16x512xbf16, #tpu.memory_space<vmem>>, %arg4: memref<512x512xbf16, #tpu.memory_space<vmem>>, %arg5: memref<1x512xf32, #tpu.memory_space<vmem>>, %arg6: memref<512x64xbf16, #tpu.memory_space<vmem>>, %arg7: memref<1x64xf32, #tpu.memory_space<vmem>>, %arg8: memref<3x512xf32, #tpu.memory_space<vmem>>, %arg9: memref<512x512xbf16, #tpu.memory_space<vmem>>, %arg10: memref<1x512xf32, #tpu.memory_space<vmem>>, %arg11: memref<512x64xbf16, #tpu.memory_space<vmem>>, %arg12: memref<1x64xf32, #tpu.memory_space<vmem>>, %arg13: memref<1x16x8xf32, #tpu.memory_space<vmem>>) attributes {dimension_semantics = [#tpu.dimension_semantics<parallel>, #tpu.dimension_semantics<parallel>], iteration_bounds = array<i64: 1, 2>, scalar_prefetch = 0 : i64, scratch_operands = 0 : i64, tpu.core_type = #tpu.core_type<tc>, window_params = [{transform_indices = @transform_0, window_bounds = array<i64: 1, 2, 512>}, {transform_indices = @transform_1, window_bounds = array<i64: 16, 512>}, {pipeline_mode = #tpu.pipeline_mode<synchronous>, transform_indices = @transform_2, window_bounds = array<i64: 512, 512>}, {pipeline_mode = #tpu.pipeline_mode<synchronous>, transform_indices = @transform_3, window_bounds = array<i64: 1, 512>}, {pipeline_mode = #tpu.pipeline_mode<synchronous>, transform_indices = @transform_4, window_bounds = array<i64: 512, 64>}, {pipeline_mode = #tpu.pipeline_mode<synchronous>, transform_indices = @transform_5, window_bounds = array<i64: 1, 64>}, {pipeline_mode = #tpu.pipeline_mode<synchronous>, transform_indices = @transform_6, window_bounds = array<i64: 3, 512>}, {pipeline_mode = #tpu.pipeline_mode<synchronous>, transform_indices = @transform_7, window_bounds = array<i64: 512, 512>}, {pipeline_mode = #tpu.pipeline_mode<synchronous>, transform_indices = @transform_8, window_bounds = array<i64: 1, 512>}, {pipeline_mode = #tpu.pipeline_mode<synchronous>, transform_indices = @transform_9, window_bounds = array<i64: 512, 64>}, {pipeline_mode = #tpu.pipeline_mode<synchronous>, transform_indices = @transform_10, window_bounds = array<i64: 1, 64>}, {transform_indices = @transform_11, window_bounds = array<i64: 1, 16, 8>}]} {
    %c0 = arith.constant 0 : index
    %c0_0 = arith.constant 0 : index
    %c0_1 = arith.constant 0 : index
    %0 = vector.load %arg2[%c0, %c0_0, %c0_1] : memref<1x2x512xf32, #tpu.memory_space<vmem>>, vector<1x2x512xf32>
    %1 = vector.shape_cast %0 : vector<1x2x512xf32> to vector<2x512xf32>
    %2 = vector.extract_strided_slice %1 {offsets = [0, 0], sizes = [1, 512], strides = [1, 1]} : vector<2x512xf32> to vector<1x512xf32>
    %3 = arith.truncf %2 : vector<1x512xf32> to vector<1x512xbf16>
    %4 = vector.extract_strided_slice %1 {offsets = [1, 0], sizes = [1, 512], strides = [1, 1]} : vector<2x512xf32> to vector<1x512xf32>
    %c0_2 = arith.constant 0 : index
    %c0_3 = arith.constant 0 : index
    %5 = vector.load %arg3[%c0_2, %c0_3] : memref<16x512xbf16, #tpu.memory_space<vmem>>, vector<16x512xbf16>
    %6 = vector.broadcast %3 : vector<1x512xbf16> to vector<16x512xbf16>
    %7 = arith.addf %6, %5 : vector<16x512xbf16>
    %cst = arith.constant 0.000000e+00 : bf16
    %8 = vector.broadcast %cst : bf16 to vector<16x512xbf16>
    %9 = arith.maximumf %7, %8 : vector<16x512xbf16>
    %c0_4 = arith.constant 0 : index
    %c0_5 = arith.constant 0 : index
    %10 = vector.load %arg4[%c0_4, %c0_5] : memref<512x512xbf16, #tpu.memory_space<vmem>>, vector<512x512xbf16>
    %cst_6 = arith.constant dense<0.000000e+00> : vector<16x512xf32>
    %11 = tpu.matmul %9, %10, %cst_6 {dimension_numbers = #tpu.dot_dimension_numbers<[1], [0], [0], [1], [0, 0, 1, 1], [], []>} : vector<16x512xbf16>, vector<512x512xbf16>, vector<16x512xf32> -> vector<16x512xf32>
    %c0_7 = arith.constant 0 : index
    %c0_8 = arith.constant 0 : index
    %12 = vector.load %arg5[%c0_7, %c0_8] : memref<1x512xf32, #tpu.memory_space<vmem>>, vector<1x512xf32>
    %13 = vector.broadcast %12 : vector<1x512xf32> to vector<16x512xf32>
    %14 = arith.addf %11, %13 : vector<16x512xf32>
    %cst_9 = arith.constant 0.000000e+00 : f32
    %15 = vector.broadcast %cst_9 : f32 to vector<16x512xf32>
    %16 = arith.maximumf %14, %15 : vector<16x512xf32>
    %17 = arith.truncf %16 : vector<16x512xf32> to vector<16x512xbf16>
    %c0_10 = arith.constant 0 : index
    %c0_11 = arith.constant 0 : index
    %18 = vector.load %arg6[%c0_10, %c0_11] : memref<512x64xbf16, #tpu.memory_space<vmem>>, vector<512x64xbf16>
    %cst_12 = arith.constant dense<0.000000e+00> : vector<16x64xf32>
    %19 = tpu.matmul %17, %18, %cst_12 {dimension_numbers = #tpu.dot_dimension_numbers<[1], [0], [0], [1], [0, 0, 1, 1], [], []>} : vector<16x512xbf16>, vector<512x64xbf16>, vector<16x64xf32> -> vector<16x64xf32>
    %c0_13 = arith.constant 0 : index
    %c0_14 = arith.constant 0 : index
    %20 = vector.load %arg7[%c0_13, %c0_14] : memref<1x64xf32, #tpu.memory_space<vmem>>, vector<1x64xf32>
    %21 = vector.broadcast %20 : vector<1x64xf32> to vector<16x64xf32>
    %22 = arith.addf %19, %21 : vector<16x64xf32>
    %23 = vector.extract_strided_slice %22 {offsets = [0, 0], sizes = [16, 1], strides = [1, 1]} : vector<16x64xf32> to vector<16x1xf32>
    %c0_15 = arith.constant 0 : index
    %c0_16 = arith.constant 0 : index
    %24 = vector.load %arg8[%c0_15, %c0_16] : memref<3x512xf32, #tpu.memory_space<vmem>>, vector<1x512xf32>
    %25 = vector.broadcast %23 : vector<16x1xf32> to vector<16x512xf32>
    %26 = vector.broadcast %24 : vector<1x512xf32> to vector<16x512xf32>
    %27 = arith.mulf %25, %26 : vector<16x512xf32>
    %28 = vector.broadcast %4 : vector<1x512xf32> to vector<16x512xf32>
    %29 = arith.addf %28, %27 : vector<16x512xf32>
    %30 = vector.extract_strided_slice %22 {offsets = [0, 1], sizes = [16, 1], strides = [1, 1]} : vector<16x64xf32> to vector<16x1xf32>
    %c1 = arith.constant 1 : index
    %c0_17 = arith.constant 0 : index
    %31 = vector.load %arg8[%c1, %c0_17] : memref<3x512xf32, #tpu.memory_space<vmem>>, vector<1x512xf32>
    %32 = vector.broadcast %30 : vector<16x1xf32> to vector<16x512xf32>
    %33 = vector.broadcast %31 : vector<1x512xf32> to vector<16x512xf32>
    %34 = arith.mulf %32, %33 : vector<16x512xf32>
    %35 = arith.addf %29, %34 : vector<16x512xf32>
    %36 = vector.extract_strided_slice %22 {offsets = [0, 2], sizes = [16, 1], strides = [1, 1]} : vector<16x64xf32> to vector<16x1xf32>
    %c2 = arith.constant 2 : index
    %c0_18 = arith.constant 0 : index
    %37 = vector.load %arg8[%c2, %c0_18] : memref<3x512xf32, #tpu.memory_space<vmem>>, vector<1x512xf32>
    %38 = vector.broadcast %36 : vector<16x1xf32> to vector<16x512xf32>
    %39 = vector.broadcast %37 : vector<1x512xf32> to vector<16x512xf32>
    %40 = arith.mulf %38, %39 : vector<16x512xf32>
    %41 = arith.addf %35, %40 : vector<16x512xf32>
    %cst_19 = arith.constant 0.000000e+00 : f32
    %42 = vector.broadcast %cst_19 : f32 to vector<16x512xf32>
    %43 = arith.maximumf %41, %42 : vector<16x512xf32>
    %44 = arith.truncf %43 : vector<16x512xf32> to vector<16x512xbf16>
    %c0_20 = arith.constant 0 : index
    %c0_21 = arith.constant 0 : index
    %45 = vector.load %arg9[%c0_20, %c0_21] : memref<512x512xbf16, #tpu.memory_space<vmem>>, vector<512x512xbf16>
    %cst_22 = arith.constant dense<0.000000e+00> : vector<16x512xf32>
    %46 = tpu.matmul %44, %45, %cst_22 {dimension_numbers = #tpu.dot_dimension_numbers<[1], [0], [0], [1], [0, 0, 1, 1], [], []>} : vector<16x512xbf16>, vector<512x512xbf16>, vector<16x512xf32> -> vector<16x512xf32>
    %c0_23 = arith.constant 0 : index
    %c0_24 = arith.constant 0 : index
    %47 = vector.load %arg10[%c0_23, %c0_24] : memref<1x512xf32, #tpu.memory_space<vmem>>, vector<1x512xf32>
    %48 = vector.broadcast %47 : vector<1x512xf32> to vector<16x512xf32>
    %49 = arith.addf %46, %48 : vector<16x512xf32>
    %cst_25 = arith.constant 0.000000e+00 : f32
    %50 = vector.broadcast %cst_25 : f32 to vector<16x512xf32>
    %51 = arith.maximumf %49, %50 : vector<16x512xf32>
    %52 = arith.truncf %51 : vector<16x512xf32> to vector<16x512xbf16>
    %c0_26 = arith.constant 0 : index
    %c0_27 = arith.constant 0 : index
    %53 = vector.load %arg11[%c0_26, %c0_27] : memref<512x64xbf16, #tpu.memory_space<vmem>>, vector<512x64xbf16>
    %cst_28 = arith.constant dense<0.000000e+00> : vector<16x64xf32>
    %54 = tpu.matmul %52, %53, %cst_28 {dimension_numbers = #tpu.dot_dimension_numbers<[1], [0], [0], [1], [0, 0, 1, 1], [], []>} : vector<16x512xbf16>, vector<512x64xbf16>, vector<16x64xf32> -> vector<16x64xf32>
    %c0_29 = arith.constant 0 : index
    %c0_30 = arith.constant 0 : index
    %55 = vector.load %arg12[%c0_29, %c0_30] : memref<1x64xf32, #tpu.memory_space<vmem>>, vector<1x64xf32>
    %56 = vector.broadcast %55 : vector<1x64xf32> to vector<16x64xf32>
    %57 = arith.addf %54, %56 : vector<16x64xf32>
    %58 = arith.addf %22, %57 : vector<16x64xf32>
    %59 = vector.extract_strided_slice %58 {offsets = [0, 0], sizes = [16, 8], strides = [1, 1]} : vector<16x64xf32> to vector<16x8xf32>
    %c0_31 = arith.constant 0 : index
    %c0_32 = arith.constant 0 : index
    %c0_33 = arith.constant 0 : index
    %60 = vector.load %arg13[%c0_31, %c0_32, %c0_33] : memref<1x16x8xf32, #tpu.memory_space<vmem>>, vector<1x16x8xf32>
    %61 = vector.shape_cast %60 : vector<1x16x8xf32> to vector<16x8xf32>
    %62 = vector.shape_cast %59 : vector<16x8xf32> to vector<1x16x8xf32>
    tpu.vector_store %arg13[%c0_31, %c0_32, %c0_33], %62 {strides = array<i32>} : memref<1x16x8xf32, #tpu.memory_space<vmem>>, vector<1x16x8xf32>,
    return
  }
  func.func @transform_0(%arg0: i32, %arg1: i32) -> (i32, i32, i32) {
    %c0_i32 = arith.constant 0 : i32
    %c0_i32_0 = arith.constant 0 : i32
    %c0_i32_1 = arith.constant 0 : i32
    return %arg1, %c0_i32, %c0_i32_0 : i32, i32, i32
  }
  func.func @transform_1(%arg0: i32, %arg1: i32) -> (i32, i32) {
    %c0_i32 = arith.constant 0 : i32
    %c0_i32_0 = arith.constant 0 : i32
    return %arg0, %c0_i32 : i32, i32
  }
  func.func @transform_2(%arg0: i32, %arg1: i32) -> (i32, i32) {
    %c0_i32 = arith.constant 0 : i32
    %c0_i32_0 = arith.constant 0 : i32
    %c0_i32_1 = arith.constant 0 : i32
    return %c0_i32, %c0_i32_0 : i32, i32
  }
  func.func @transform_3(%arg0: i32, %arg1: i32) -> (i32, i32) {
    %c0_i32 = arith.constant 0 : i32
    %c0_i32_0 = arith.constant 0 : i32
    %c0_i32_1 = arith.constant 0 : i32
    return %c0_i32, %c0_i32_0 : i32, i32
  }
  func.func @transform_4(%arg0: i32, %arg1: i32) -> (i32, i32) {
    %c0_i32 = arith.constant 0 : i32
    %c0_i32_0 = arith.constant 0 : i32
    %c0_i32_1 = arith.constant 0 : i32
    return %c0_i32, %c0_i32_0 : i32, i32
  }
  func.func @transform_5(%arg0: i32, %arg1: i32) -> (i32, i32) {
    %c0_i32 = arith.constant 0 : i32
    %c0_i32_0 = arith.constant 0 : i32
    %c0_i32_1 = arith.constant 0 : i32
    return %c0_i32, %c0_i32_0 : i32, i32
  }
  func.func @transform_6(%arg0: i32, %arg1: i32) -> (i32, i32) {
    %c0_i32 = arith.constant 0 : i32
    %c0_i32_0 = arith.constant 0 : i32
    %c0_i32_1 = arith.constant 0 : i32
    return %c0_i32, %c0_i32_0 : i32, i32
  }
  func.func @transform_7(%arg0: i32, %arg1: i32) -> (i32, i32) {
    %c0_i32 = arith.constant 0 : i32
    %c0_i32_0 = arith.constant 0 : i32
    %c0_i32_1 = arith.constant 0 : i32
    return %c0_i32, %c0_i32_0 : i32, i32
  }
  func.func @transform_8(%arg0: i32, %arg1: i32) -> (i32, i32) {
    %c0_i32 = arith.constant 0 : i32
    %c0_i32_0 = arith.constant 0 : i32
    %c0_i32_1 = arith.constant 0 : i32
    return %c0_i32, %c0_i32_0 : i32, i32
  }
  func.func @transform_9(%arg0: i32, %arg1: i32) -> (i32, i32) {
    %c0_i32 = arith.constant 0 : i32
    %c0_i32_0 = arith.constant 0 : i32
    %c0_i32_1 = arith.constant 0 : i32
    return %c0_i32, %c0_i32_0 : i32, i32
  }
  func.func @transform_10(%arg0: i32, %arg1: i32) -> (i32, i32) {
    %c0_i32 = arith.constant 0 : i32
    %c0_i32_0 = arith.constant 0 : i32
    %c0_i32_1 = arith.constant 0 : i32
    return %c0_i32, %c0_i32_0 : i32, i32
  }
  func.func @transform_11(%arg0: i32, %arg1: i32) -> (i32, i32, i32) {
    %c0_i32 = arith.constant 0 : i32
    %c0_i32_0 = arith.constant 0 : i32
    return %arg1, %arg0, %c0_i32 : i32, i32, i32
  }
}

</mosaic_0001>

<llo_original>
// kernel: folding_net_ndim_forward.1
$region0: #{folding_net_ndim_forward.1}
  #allocation0 [shape = 'u32[]', space=smem, size = 0x4, offset = 0x4, fixed_abs, tag = 'smem constant byte address 0x4 - core index']
  #allocation1 [shape = 'u32[144,128]{1,0:T(1,128)}', space=vmem, size = 0x12000, scoped, tag = 'internal scratch']
  %s0 = inlined_call_operand.vmem [shape: f32[2,2,512], index: 0, kind: input, shape index: {}]
  %s1 = inlined_call_operand.vmem [shape: bf16[16,512], index: 1, kind: input, shape index: {}]
  %s2 = inlined_call_operand.vmem [shape: bf16[512,512], index: 2, kind: input, shape index: {}]
  %s3 = inlined_call_operand.vmem [shape: f32[1,512], index: 3, kind: input, shape index: {}]
  %s4 = inlined_call_operand.vmem [shape: bf16[512,64], index: 4, kind: input, shape index: {}]
  %s5 = inlined_call_operand.vmem [shape: f32[1,64], index: 5, kind: input, shape index: {}]
  %s6 = inlined_call_operand.vmem [shape: f32[3,512], index: 6, kind: input, shape index: {}]
  %s7 = inlined_call_operand.vmem [shape: bf16[512,512], index: 7, kind: input, shape index: {}]
  %s8 = inlined_call_operand.vmem [shape: f32[1,512], index: 8, kind: input, shape index: {}]
  %s9 = inlined_call_operand.vmem [shape: bf16[512,64], index: 9, kind: input, shape index: {}]
  %s10 = inlined_call_operand.vmem [shape: f32[1,64], index: 10, kind: input, shape index: {}]
  %s11 = inlined_call_operand.vmem [shape: f32[2,16,8], index: 11, kind: output, shape index: {}]
  %s12 = sld [smem:[#allocation0]]
  $region77: #{folding_net_ndim_forward.1} parent=0
    _
  %s14 = ssub.s32 1, %s12
  %s15 = scalar_select 0, %s14, %s12
  loop: start=0, step=1, limit=4
  $region2: #{folding_net_ndim_forward.1} parent=0 // loop_pre_header
    _
  $region3: #{folding_net_ndim_forward.1} parent=0 // loop_header
    %s17 = sphi 0, %s21
    %p18 = scmp.ge.s32.totalorder %s17, 4
    %s24 = sphi 0, %s36
    %s25 = sphi 0, %s32
    %s26 = sphi 0, %s24
    %s27 = sphi 0, %s25
    %s28 = sphi 0, %s26
    %s29 = sphi 0, %s27
    %s39 = sphi 0, %s41
    %s42 = sphi 0, %s39
    %s43 = sphi 0, %s42
    %s59 = sphi 0, %s43
    %s65 = sphi 0, %s67
    %s68 = sphi 0, %s65
    %s69 = sphi 0, %s68
    %s85 = sphi 0, %s69
    %s89 = sphi 0, %s89
    %s91 = sphi 0, %s89
    %s92 = sphi 0, %s91
    %s106 = sphi 0, %s92
    %s110 = sphi 0, %s110
    %s112 = sphi 0, %s110
    %s113 = sphi 0, %s112
    %s127 = sphi 0, %s113
    %s131 = sphi 0, %s131
    %s133 = sphi 0, %s131
    %s134 = sphi 0, %s133
    %s148 = sphi 0, %s134
    %s152 = sphi 0, %s152
    %s154 = sphi 0, %s152
    %s155 = sphi 0, %s154
    %s169 = sphi 0, %s155
    %s173 = sphi 0, %s173
    %s175 = sphi 0, %s173
    %s176 = sphi 0, %s175
    %s190 = sphi 0, %s176
    %s194 = sphi 0, %s194
    %s196 = sphi 0, %s194
    %s197 = sphi 0, %s196
    %s211 = sphi 0, %s197
    %s215 = sphi 0, %s215
    %s217 = sphi 0, %s215
    %s218 = sphi 0, %s217
    %s232 = sphi 0, %s218
    %s236 = sphi 0, %s236
    %s238 = sphi 0, %s236
    %s239 = sphi 0, %s238
    %s253 = sphi 0, %s239
    %s257 = sphi 0, %s257
    %s259 = sphi 0, %s257
    %s260 = sphi 0, %s259
    %s274 = sphi 0, %s260
    %s282 = sphi 0, %s284
    %s285 = sphi 0, %s282
    %s286 = sphi 0, %s285
    %s302 = sphi 0, %s286
  $region4: #{folding_net_ndim_forward.1} parent=0 // loop_header_branch
    %20 = sbr.rel (%p18) target = $region8
  $region5: #{folding_net_ndim_forward.1} parent=0 // loop_body
    %s22 = ssub.s32 %s17, 1
    %s23 = ssub.s32 %s17, 2
    %s30 = sadd.s32 1, %s25
    %p31 = scmp.ge.s32.totalorder %s30, 2
    %s32 = scalar_select %p31, 0, %s30
    %s33 = sadd.s32 1, %s24
    %s34 = scalar_select %p31, %s33, %s24
    %p35 = scmp.ge.s32.totalorder %s34, 1
    %s36 = scalar_select %p35, 0, %s34
    %s37 = ssub.s32 %s25, %s32
    %p38 = scmp.eq.s32.totalorder %s37, 0
    %s40 = sadd.s32 %s39, 1
    %s41 = scalar_select %p38, %s39, %s40
    %p44 = pneg %p38
    %p45 = scmp.eq.s32.totalorder %s17, 1
    %p46 = por %p44, %p45
    %p47 = scmp.ne.s32.totalorder %s39, %s42
    %p48 = scmp.eq.s32.totalorder %s17, 0
    %p49 = por %p47, %p48
    %p50 = scmp.ne.s32.totalorder %s39, %s42
    %p51 = scmp.eq.s32.totalorder %s22, 1
    %p52 = por %p50, %p51
    %p53 = scmp.ne.s32.totalorder %s42, %s43
    %p54 = scmp.eq.s32.totalorder %s22, 0
    %p55 = por %p53, %p54
    %p56 = scmp.ne.s32.totalorder %s42, %s43
    %p57 = scmp.eq.s32.totalorder %s23, 1
    %p58 = por %p56, %p57
    %p60 = scmp.ne.s32.totalorder %s43, %s59
    %p61 = scmp.eq.s32.totalorder %s23, 0
    %p62 = por %p60, %p61
    %s63 = ssub.s32 %s24, %s36
    %p64 = scmp.eq.s32.totalorder %s63, 0
    %s66 = sadd.s32 %s65, 1
    %s67 = scalar_select %p64, %s65, %s66
    %p70 = pneg %p64
    %p71 = scmp.eq.s32.totalorder %s17, 1
    %p72 = por %p70, %p71
    %p73 = scmp.ne.s32.totalorder %s65, %s68
    %p74 = scmp.eq.s32.totalorder %s17, 0
    %p75 = por %p73, %p74
    %p76 = scmp.ne.s32.totalorder %s65, %s68
    %p77 = scmp.eq.s32.totalorder %s22, 1
    %p78 = por %p76, %p77
    %p79 = scmp.ne.s32.totalorder %s68, %s69
    %p80 = scmp.eq.s32.totalorder %s22, 0
    %p81 = por %p79, %p80
    %p82 = scmp.ne.s32.totalorder %s68, %s69
    %p83 = scmp.eq.s32.totalorder %s23, 1
    %p84 = por %p82, %p83
    %p86 = scmp.ne.s32.totalorder %s69, %s85
    %p87 = scmp.eq.s32.totalorder %s23, 0
    %p88 = por %p86, %p87
    %s90 = sadd.s32 %s89, 1
    %p93 = scmp.eq.s32.totalorder %s17, 1
    %p94 = scmp.ne.s32.totalorder %s89, %s91
    %p95 = scmp.eq.s32.totalorder %s17, 0
    %p96 = por %p94, %p95
    %p97 = scmp.ne.s32.totalorder %s89, %s91
    %p98 = scmp.eq.s32.totalorder %s22, 1
    %p99 = por %p97, %p98
    %p100 = scmp.ne.s32.totalorder %s91, %s92
    %p101 = scmp.eq.s32.totalorder %s22, 0
    %p102 = por %p100, %p101
    %p103 = scmp.ne.s32.totalorder %s91, %s92
    %p104 = scmp.eq.s32.totalorder %s23, 1
    %p105 = por %p103, %p104
    %p107 = scmp.ne.s32.totalorder %s92, %s106
    %p108 = scmp.eq.s32.totalorder %s23, 0
    %p109 = por %p107, %p108
    %s111 = sadd.s32 %s110, 1
    %p114 = scmp.eq.s32.totalorder %s17, 1
    %p115 = scmp.ne.s32.totalorder %s110, %s112
    %p116 = scmp.eq.s32.totalorder %s17, 0
    %p117 = por %p115, %p116
    %p118 = scmp.ne.s32.totalorder %s110, %s112
    %p119 = scmp.eq.s32.totalorder %s22, 1
    %p120 = por %p118, %p119
    %p121 = scmp.ne.s32.totalorder %s112, %s113
    %p122 = scmp.eq.s32.totalorder %s22, 0
    %p123 = por %p121, %p122
    %p124 = scmp.ne.s32.totalorder %s112, %s113
    %p125 = scmp.eq.s32.totalorder %s23, 1
    %p126 = por %p124, %p125
    %p128 = scmp.ne.s32.totalorder %s113, %s127
    %p129 = scmp.eq.s32.totalorder %s23, 0
    %p130 = por %p128, %p129
    %s132 = sadd.s32 %s131, 1
    %p135 = scmp.eq.s32.totalorder %s17, 1
    %p136 = scmp.ne.s32.totalorder %s131, %s133
    %p137 = scmp.eq.s32.totalorder %s17, 0
    %p138 = por %p136, %p137
    %p139 = scmp.ne.s32.totalorder %s131, %s133
    %p140 = scmp.eq.s32.totalorder %s22, 1
    %p141 = por %p139, %p140
    %p142 = scmp.ne.s32.totalorder %s133, %s134
    %p143 = scmp.eq.s32.totalorder %s22, 0
    %p144 = por %p142, %p143
    %p145 = scmp.ne.s32.totalorder %s133, %s134
    %p146 = scmp.eq.s32.totalorder %s23, 1
    %p147 = por %p145, %p146
    %p149 = scmp.ne.s32.totalorder %s134, %s148
    %p150 = scmp.eq.s32.totalorder %s23, 0
    %p151 = por %p149, %p150
    %s153 = sadd.s32 %s152, 1
    %p156 = scmp.eq.s32.totalorder %s17, 1
    %p157 = scmp.ne.s32.totalorder %s152, %s154
    %p158 = scmp.eq.s32.totalorder %s17, 0
    %p159 = por %p157, %p158
    %p160 = scmp.ne.s32.totalorder %s152, %s154
    %p161 = scmp.eq.s32.totalorder %s22, 1
    %p162 = por %p160, %p161
    %p163 = scmp.ne.s32.totalorder %s154, %s155
    %p164 = scmp.eq.s32.totalorder %s22, 0
    %p165 = por %p163, %p164
    %p166 = scmp.ne.s32.totalorder %s154, %s155
    %p167 = scmp.eq.s32.totalorder %s23, 1
    %p168 = por %p166, %p167
    %p170 = scmp.ne.s32.totalorder %s155, %s169
    %p171 = scmp.eq.s32.totalorder %s23, 0
    %p172 = por %p170, %p171
    %s174 = sadd.s32 %s173, 1
    %p177 = scmp.eq.s32.totalorder %s17, 1
    %p178 = scmp.ne.s32.totalorder %s173, %s175
    %p179 = scmp.eq.s32.totalorder %s17, 0
    %p180 = por %p178, %p179
    %p181 = scmp.ne.s32.totalorder %s173, %s175
    %p182 = scmp.eq.s32.totalorder %s22, 1
    %p183 = por %p181, %p182
    %p184 = scmp.ne.s32.totalorder %s175, %s176
    %p185 = scmp.eq.s32.totalorder %s22, 0
    %p186 = por %p184, %p185
    %p187 = scmp.ne.s32.totalorder %s175, %s176
    %p188 = scmp.eq.s32.totalorder %s23, 1
    %p189 = por %p187, %p188
    %p191 = scmp.ne.s32.totalorder %s176, %s190
    %p192 = scmp.eq.s32.totalorder %s23, 0
    %p193 = por %p191, %p192
    %s195 = sadd.s32 %s194, 1
    %p198 = scmp.eq.s32.totalorder %s17, 1
    %p199 = scmp.ne.s32.totalorder %s194, %s196
    %p200 = scmp.eq.s32.totalorder %s17, 0
    %p201 = por %p199, %p200
    %p202 = scmp.ne.s32.totalorder %s194, %s196
    %p203 = scmp.eq.s32.totalorder %s22, 1
    %p204 = por %p202, %p203
    %p205 = scmp.ne.s32.totalorder %s196, %s197
    %p206 = scmp.eq.s32.totalorder %s22, 0
    %p207 = por %p205, %p206
    %p208 = scmp.ne.s32.totalorder %s196, %s197
    %p209 = scmp.eq.s32.totalorder %s23, 1
    %p210 = por %p208, %p209
    %p212 = scmp.ne.s32.totalorder %s197, %s211
    %p213 = scmp.eq.s32.totalorder %s23, 0
    %p214 = por %p212, %p213
    %s216 = sadd.s32 %s215, 1
    %p219 = scmp.eq.s32.totalorder %s17, 1
    %p220 = scmp.ne.s32.totalorder %s215, %s217
    %p221 = scmp.eq.s32.totalorder %s17, 0
    %p222 = por %p220, %p221
    %p223 = scmp.ne.s32.totalorder %s215, %s217
    %p224 = scmp.eq.s32.totalorder %s22, 1
    %p225 = por %p223, %p224
    %p226 = scmp.ne.s32.totalorder %s217, %s218
    %p227 = scmp.eq.s32.totalorder %s22, 0
    %p228 = por %p226, %p227
    %p229 = scmp.ne.s32.totalorder %s217, %s218
    %p230 = scmp.eq.s32.totalorder %s23, 1
    %p231 = por %p229, %p230
    %p233 = scmp.ne.s32.totalorder %s218, %s232
    %p234 = scmp.eq.s32.totalorder %s23, 0
    %p235 = por %p233, %p234
    %s237 = sadd.s32 %s236, 1
    %p240 = scmp.eq.s32.totalorder %s17, 1
    %p241 = scmp.ne.s32.totalorder %s236, %s238
    %p242 = scmp.eq.s32.totalorder %s17, 0
    %p243 = por %p241, %p242
    %p244 = scmp.ne.s32.totalorder %s236, %s238
    %p245 = scmp.eq.s32.totalorder %s22, 1
    %p246 = por %p244, %p245
    %p247 = scmp.ne.s32.totalorder %s238, %s239
    %p248 = scmp.eq.s32.totalorder %s22, 0
    %p249 = por %p247, %p248
    %p250 = scmp.ne.s32.totalorder %s238, %s239
    %p251 = scmp.eq.s32.totalorder %s23, 1
    %p252 = por %p250, %p251
    %p254 = scmp.ne.s32.totalorder %s239, %s253
    %p255 = scmp.eq.s32.totalorder %s23, 0
    %p256 = por %p254, %p255
    %s258 = sadd.s32 %s257, 1
    %p261 = scmp.eq.s32.totalorder %s17, 1
    %p262 = scmp.ne.s32.totalorder %s257, %s259
    %p263 = scmp.eq.s32.totalorder %s17, 0
    %p264 = por %p262, %p263
    %p265 = scmp.ne.s32.totalorder %s257, %s259
    %p266 = scmp.eq.s32.totalorder %s22, 1
    %p267 = por %p265, %p266
    %p268 = scmp.ne.s32.totalorder %s259, %s260
    %p269 = scmp.eq.s32.totalorder %s22, 0
    %p270 = por %p268, %p269
    %p271 = scmp.ne.s32.totalorder %s259, %s260
    %p272 = scmp.eq.s32.totalorder %s23, 1
    %p273 = por %p271, %p272
    %p275 = scmp.ne.s32.totalorder %s260, %s274
    %p276 = scmp.eq.s32.totalorder %s23, 0
    %p277 = por %p275, %p276
    %s278 = ssub.s32 %s25, %s32
    %s279 = ssub.s32 %s24, %s36
    %s280 = sor.u32 %s278, %s279
    %p281 = scmp.eq.s32.totalorder %s280, 0
    %s283 = sadd.s32 %s282, 1
    %s284 = scalar_select %p281, %s282, %s283
    %p287 = pneg %p281
    %p288 = scmp.eq.s32.totalorder %s17, 1
    %p289 = por %p287, %p288
    %p290 = scmp.ne.s32.totalorder %s282, %s285
    %p291 = scmp.eq.s32.totalorder %s17, 0
    %p292 = por %p290, %p291
    %p293 = scmp.ne.s32.totalorder %s282, %s285
    %p294 = scmp.eq.s32.totalorder %s22, 1
    %p295 = por %p293, %p294
    %p296 = scmp.ne.s32.totalorder %s285, %s286
    %p297 = scmp.eq.s32.totalorder %s22, 0
    %p298 = por %p296, %p297
    %p299 = scmp.ne.s32.totalorder %s285, %s286
    %p300 = scmp.eq.s32.totalorder %s23, 1
    %p301 = por %p299, %p300
    %p303 = scmp.ne.s32.totalorder %s286, %s302
    %p304 = scmp.eq.s32.totalorder %s23, 0
    %p305 = por %p303, %p304
    %p306 = scmp.le.s32.totalorder 1, %s17
    %p307 = scmp.lt.s32.totalorder %s17, 3
    %p308 = pnand %p306, %p307
    %p309 = pneg %p308
    // Predicated region
    $region9: #{folding_net_ndim_forward.1} parent=5 // pred_check
      _
    $region10: #{folding_net_ndim_forward.1} parent=5 // pred_check_branch
      %311 = sbr.rel (%p308) target = $region12
    $region11: #{folding_net_ndim_forward.1} parent=5 // pred_region
      %s312 = ssub.s32 %s17, 1
      // Predicated region
      $region13: #{folding_net_ndim_forward.1} parent=11 // pred_check
        %p313 = pneg %p81
      $region14: #{folding_net_ndim_forward.1} parent=11 // pred_check_branch
        %315 = sbr.rel (%p313) target = $region16
      $region15: #{folding_net_ndim_forward.1} parent=11 // pred_region
        %s316 = smul.u32 2, %s26
        %p317 = scmp.lt.s32.totalorder %s316, 1
        %s318 = scalar_select %p317, %s316, 1
        %s319 = smul.addr %s318, 4
        %s320 = smul.addr %s319, 4
        %s321 = scalar_lea.vmem %s1, %s320
        %s322 = smul.u32 2, %s26
      $region16: #{folding_net_ndim_forward.1} parent=11 // pred_fallthru
        _
      // Predicated region
      $region17: #{folding_net_ndim_forward.1} parent=11 // pred_check
        %p323 = pneg %p102
      $region18: #{folding_net_ndim_forward.1} parent=11 // pred_check_branch
        %325 = sbr.rel (%p323) target = $region20
      $region19: #{folding_net_ndim_forward.1} parent=11 // pred_region
        _
      $region20: #{folding_net_ndim_forward.1} parent=11 // pred_fallthru
        _
      // Predicated region
      $region21: #{folding_net_ndim_forward.1} parent=11 // pred_check
        %p326 = pneg %p123
      $region22: #{folding_net_ndim_forward.1} parent=11 // pred_check_branch
        %328 = sbr.rel (%p326) target = $region24
      $region23: #{folding_net_ndim_forward.1} parent=11 // pred_region
        _
      $region24: #{folding_net_ndim_forward.1} parent=11 // pred_fallthru
        _
      // Predicated region
      $region25: #{folding_net_ndim_forward.1} parent=11 // pred_check
        %p329 = pneg %p144
      $region26: #{folding_net_ndim_forward.1} parent=11 // pred_check_branch
        %331 = sbr.rel (%p329) target = $region28
      $region27: #{folding_net_ndim_forward.1} parent=11 // pred_region
        _
      $region28: #{folding_net_ndim_forward.1} parent=11 // pred_fallthru
        _
      // Predicated region
      $region29: #{folding_net_ndim_forward.1} parent=11 // pred_check
        %p332 = pneg %p165
      $region30: #{folding_net_ndim_forward.1} parent=11 // pred_check_branch
        %334 = sbr.rel (%p332) target = $region32
      $region31: #{folding_net_ndim_forward.1} parent=11 // pred_region
        _
      $region32: #{folding_net_ndim_forward.1} parent=11 // pred_fallthru
        _
      // Predicated region
      $region33: #{folding_net_ndim_forward.1} parent=11 // pred_check
        %p335 = pneg %p186
      $region34: #{folding_net_ndim_forward.1} parent=11 // pred_check_branch
        %337 = sbr.rel (%p335) target = $region36
      $region35: #{folding_net_ndim_forward.1} parent=11 // pred_region
        _
      $region36: #{folding_net_ndim_forward.1} parent=11 // pred_fallthru
        _
      // Predicated region
      $region37: #{folding_net_ndim_forward.1} parent=11 // pred_check
        %p338 = pneg %p207
      $region38: #{folding_net_ndim_forward.1} parent=11 // pred_check_branch
        %340 = sbr.rel (%p338) target = $region40
      $region39: #{folding_net_ndim_forward.1} parent=11 // pred_region
        _
      $region40: #{folding_net_ndim_forward.1} parent=11 // pred_fallthru
        _
      // Predicated region
      $region41: #{folding_net_ndim_forward.1} parent=11 // pred_check
        %p341 = pneg %p228
      $region42: #{folding_net_ndim_forward.1} parent=11 // pred_check_branch
        %343 = sbr.rel (%p341) target = $region44
      $region43: #{folding_net_ndim_forward.1} parent=11 // pred_region
        _
      $region44: #{folding_net_ndim_forward.1} parent=11 // pred_fallthru
        _
      // Predicated region
      $region45: #{folding_net_ndim_forward.1} parent=11 // pred_check
        %p344 = pneg %p249
      $region46: #{folding_net_ndim_forward.1} parent=11 // pred_check_branch
        %346 = sbr.rel (%p344) target = $region48
      $region47: #{folding_net_ndim_forward.1} parent=11 // pred_region
        _
      $region48: #{folding_net_ndim_forward.1} parent=11 // pred_fallthru
        _
      // Predicated region
      $region49: #{folding_net_ndim_forward.1} parent=11 // pred_check
        %p347 = pneg %p270
      $region50: #{folding_net_ndim_forward.1} parent=11 // pred_check_branch
        %349 = sbr.rel (%p347) target = $region52
      $region51: #{folding_net_ndim_forward.1} parent=11 // pred_region
        _
      $region52: #{folding_net_ndim_forward.1} parent=11 // pred_fallthru
        _
    $region12: #{folding_net_ndim_forward.1} parent=5 // pred_fallthru
      _
    %p350 = scmp.lt.s32.totalorder %s17, 2
    // Predicated region
    $region53: #{folding_net_ndim_forward.1} parent=5 // pred_check
      %p351 = pneg %p350
    $region54: #{folding_net_ndim_forward.1} parent=5 // pred_check_branch
      %353 = sbr.rel (%p351) target = $region56
    $region55: #{folding_net_ndim_forward.1} parent=5 // pred_region
      // Predicated region
      $region57: #{folding_net_ndim_forward.1} parent=55 // pred_check
        %p354 = pneg %p49
      $region58: #{folding_net_ndim_forward.1} parent=55 // pred_check_branch
        %356 = sbr.rel (%p354) target = $region60
      $region59: #{folding_net_ndim_forward.1} parent=55 // pred_region
        %p357 = scmp.lt.s32.totalorder %s25, 1
        %s358 = scalar_select %p357, %s25, 1
        %s359 = smul.addr %s358, 4
        %s360 = smul.addr %s359, 2
        %s361 = scalar_lea.vmem %s0, %s360
      $region60: #{folding_net_ndim_forward.1} parent=55 // pred_fallthru
        _
    $region56: #{folding_net_ndim_forward.1} parent=5 // pred_fallthru
      _
    %p362 = scmp.le.s32.totalorder 1, %s17
    %p363 = scmp.lt.s32.totalorder %s17, 3
    %p364 = pnand %p362, %p363
    %p365 = pneg %p364
    // Predicated region
    $region61: #{folding_net_ndim_forward.1} parent=5 // pred_check
      _
    $region62: #{folding_net_ndim_forward.1} parent=5 // pred_check_branch
      %367 = sbr.rel (%p364) target = $region64
    $region63: #{folding_net_ndim_forward.1} parent=5 // pred_region
      %s368 = ssub.s32 %s17, 1
      %p369 = scmp.lt.s32.totalorder %s27, 1
      %s370 = scalar_select %p369, %s27, 1
      %s371 = smul.addr %s370, 4
      %s372 = smul.addr %s371, 2
      %s373 = scalar_lea.vmem %s0, %s372
      %p374 = pneg %p55
      %p375 = pneg %p52
      %s376 = smul.u32 2, %s26
      %p377 = scmp.lt.s32.totalorder %s376, 1
      %s378 = scalar_select %p377, %s376, 1
      %s379 = smul.addr %s378, 4
      %s380 = smul.addr %s379, 4
      %s381 = scalar_lea.vmem %s1, %s380
      %p382 = pneg %p81
      %p383 = pneg %p78
      %p384 = pneg %p102
      %p385 = pneg %p99
      %p386 = pneg %p123
      %p387 = pneg %p120
      %p388 = pneg %p144
      %p389 = pneg %p141
      %p390 = pneg %p165
      %p391 = pneg %p162
      %p392 = pneg %p186
      %p393 = pneg %p183
      %p394 = pneg %p207
      %p395 = pneg %p204
      %p396 = pneg %p228
      %p397 = pneg %p225
      %p398 = pneg %p249
      %p399 = pneg %p246
      %p400 = pneg %p270
      %p401 = pneg %p267
      %p402 = pneg %p298
      %p403 = pneg %p295
      %s404 = smul.u32 2, %s26
      %p405 = scmp.lt.s32.totalorder %s27, 1
      %s406 = scalar_select %p405, %s27, 1
      %p407 = scmp.lt.s32.totalorder %s404, 1
      %s408 = scalar_select %p407, %s404, 1
      %s409 = smul.addr %s406, 2
      %s410 = sadd.s32 %s408, %s409
      %s411 = smul.addr %s410, 8
      %s412 = scalar_lea.vmem %s11, %s411
      %p413 = scmp.lt.s32.totalorder %s27, 1
      %s414 = scalar_select %p413, %s27, 1
      %s415 = smul.addr %s414, 4
      %s416 = smul.addr %s415, 2
      %s417 = scalar_lea.vmem %s0, %s416
      %s418 = smul.u32 2, %s26
      %p419 = scmp.lt.s32.totalorder %s418, 1
      %s420 = scalar_select %p419, %s418, 1
      %s421 = smul.addr %s420, 4
      %s422 = smul.addr %s421, 4
      %s423 = scalar_lea.vmem %s1, %s422
      %s424 = smul.u32 2, %s26
      %s425 = smul.u32 2, %s26
      %p426 = scmp.lt.s32.totalorder %s27, 1
      %s427 = scalar_select %p426, %s27, 1
      %p428 = scmp.lt.s32.totalorder %s425, 1
      %s429 = scalar_select %p428, %s425, 1
      %s430 = smul.addr %s427, 2
      %s431 = sadd.s32 %s429, %s430
      %s432 = smul.addr %s431, 8
      %s433 = scalar_lea.vmem %s11, %s432
      %s434 = smul.u32 2, %s26
      %v436 = vld [vmem:[%s417] sm:$0xff]
      %v438 = vlaneseq
      %v439 = vshrl.u32 %v438, 7
      %v440 = vsub.s32 0, %v439
      %v441 = vrot.slane %v436, %v440
      %v442 = vlaneseq
      %v443 = vshrl.u32 %v442, 7
      %v444 = vsub.s32 2, %v443
      %v445 = vrot.slane %v436, %v444
      %v446 = vlaneseq
      %v447 = vshrl.u32 %v446, 7
      %v448 = vsub.s32 4, %v447
      %v449 = vrot.slane %v436, %v448
      %v450 = vlaneseq
      %v451 = vshrl.u32 %v450, 7
      %v452 = vsub.s32 6, %v451
      %v453 = vrot.slane %v436, %v452
      %v458 = vpack.c.bf16 %v441, %v441
      %v459 = vpack.c.bf16 %v445, %v445
      %v460 = vpack.c.bf16 %v449, %v449
      %v461 = vpack.c.bf16 %v453, %v453
      %v462 = vld [vmem:[%s423] sm:$0xff]
      %v463 = vld [vmem:[%s423 + $0x8] sm:$0xff]
      %v464 = vld [vmem:[%s423 + $0x10] sm:$0xff]
      %v465 = vld [vmem:[%s423 + $0x18] sm:$0xff]
      %v467 = vpack.i.b16 %v458, %v458
      %v469 = vlaneseq
      %v470 = vshrl.u32 %v469, 7
      %v471 = vsub.s32 0, %v470
      %v472 = vrot.slane %v467, %v471
      %v474 = vpack.i.b16 %v459, %v459
      %v476 = vlaneseq
      %v477 = vshrl.u32 %v476, 7
      %v478 = vsub.s32 0, %v477
      %v479 = vrot.slane %v474, %v478
      %v481 = vpack.i.b16 %v460, %v460
      %v483 = vlaneseq
      %v484 = vshrl.u32 %v483, 7
      %v485 = vsub.s32 0, %v484
      %v486 = vrot.slane %v481, %v485
      %v488 = vpack.i.b16 %v461, %v461
      %v490 = vlaneseq
      %v491 = vshrl.u32 %v490, 7
      %v492 = vsub.s32 0, %v491
      %v493 = vrot.slane %v488, %v492
      %v498 = vunpack.c.l.b16 %v462
      %v499 = vunpack.c.h.b16 %v462
      %v500 = vunpack.c.l.b16 %v463
      %v501 = vunpack.c.h.b16 %v463
      %v502 = vunpack.c.l.b16 %v464
      %v503 = vunpack.c.h.b16 %v464
      %v504 = vunpack.c.l.b16 %v465
      %v505 = vunpack.c.h.b16 %v465
      %v506 = vpack.c.b16 %v502, %v498
      %v507 = vpack.c.b16 %v503, %v499
      %v508 = vpack.c.b16 %v504, %v500
      %v509 = vpack.c.b16 %v505, %v501
      %v514 = vadd.bf16 %v472, %v506
      %v515 = vadd.bf16 %v479, %v507
      %v516 = vadd.bf16 %v486, %v508
      %v517 = vadd.bf16 %v493, %v509
      %v518 = vmax.bf16 %v514, 0
      %v519 = vmax.bf16 %v515, 0
      %v520 = vmax.bf16 %v516, 0
      %v521 = vmax.bf16 %v517, 0
      %v522 = vld [vmem:[%s2] sm:$0xff]
      %v523 = vld [vmem:[%s2 + $0x8] sm:$0xff]
      %v524 = vld [vmem:[%s2 + $0x10] sm:$0xff]
      %v525 = vld [vmem:[%s2 + $0x18] sm:$0xff]
      %v526 = vld [vmem:[%s2 + $0x20] sm:$0xff]
      %v527 = vld [vmem:[%s2 + $0x28] sm:$0xff]
      %v528 = vld [vmem:[%s2 + $0x30] sm:$0xff]
      %v529 = vld [vmem:[%s2 + $0x38] sm:$0xff]
      %v530 = vld [vmem:[%s2 + $0x40] sm:$0xff]
      %v531 = vld [vmem:[%s2 + $0x48] sm:$0xff]
      %v532 = vld [vmem:[%s2 + $0x50] sm:$0xff]
      %v533 = vld [vmem:[%s2 + $0x58] sm:$0xff]
      %v534 = vld [vmem:[%s2 + $0x60] sm:$0xff]
      %v535 = vld [vmem:[%s2 + $0x68] sm:$0xff]
      %v536 = vld [vmem:[%s2 + $0x70] sm:$0xff]
      %v537 = vld [vmem:[%s2 + $0x78] sm:$0xff]
      %v538 = vld [vmem:[%s2 + $0x80] sm:$0xff]
      %v539 = vld [vmem:[%s2 + $0x88] sm:$0xff]
      %v540 = vld [vmem:[%s2 + $0x90] sm:$0xff]
      %v541 = vld [vmem:[%s2 + $0x98] sm:$0xff]
      %v542 = vld [vmem:[%s2 + $0xa0] sm:$0xff]
      %v543 = vld [vmem:[%s2 + $0xa8] sm:$0xff]
      %v544 = vld [vmem:[%s2 + $0xb0] sm:$0xff]
      %v545 = vld [vmem:[%s2 + $0xb8] sm:$0xff]
      %v546 = vld [vmem:[%s2 + $0xc0] sm:$0xff]
      %v547 = vld [vmem:[%s2 + $0xc8] sm:$0xff]
      %v548 = vld [vmem:[%s2 + $0xd0] sm:$0xff]
      %v549 = vld [vmem:[%s2 + $0xd8] sm:$0xff]
      %v550 = vld [vmem:[%s2 + $0xe0] sm:$0xff]
      %v551 = vld [vmem:[%s2 + $0xe8] sm:$0xff]
      %v552 = vld [vmem:[%s2 + $0xf0] sm:$0xff]
      %v553 = vld [vmem:[%s2 + $0xf8] sm:$0xff]
      %v554 = vld [vmem:[%s2 + $0x100] sm:$0xff]
      %v555 = vld [vmem:[%s2 + $0x108] sm:$0xff]
      %v556 = vld [vmem:[%s2 + $0x110] sm:$0xff]
      %v557 = vld [vmem:[%s2 + $0x118] sm:$0xff]
      %v558 = vld [vmem:[%s2 + $0x120] sm:$0xff]
      %v559 = vld [vmem:[%s2 + $0x128] sm:$0xff]
      %v560 = vld [vmem:[%s2 + $0x130] sm:$0xff]
      %v561 = vld [vmem:[%s2 + $0x138] sm:$0xff]
      %v562 = vld [vmem:[%s2 + $0x140] sm:$0xff]
      %v563 = vld [vmem:[%s2 + $0x148] sm:$0xff]
      %v564 = vld [vmem:[%s2 + $0x150] sm:$0xff]
      %v565 = vld [vmem:[%s2 + $0x158] sm:$0xff]
      %v566 = vld [vmem:[%s2 + $0x160] sm:$0xff]
      %v567 = vld [vmem:[%s2 + $0x168] sm:$0xff]
      %v568 = vld [vmem:[%s2 + $0x170] sm:$0xff]
      %v569 = vld [vmem:[%s2 + $0x178] sm:$0xff]
      %v570 = vld [vmem:[%s2 + $0x180] sm:$0xff]
      %v571 = vld [vmem:[%s2 + $0x188] sm:$0xff]
      %v572 = vld [vmem:[%s2 + $0x190] sm:$0xff]
      %v573 = vld [vmem:[%s2 + $0x198] sm:$0xff]
      %v574 = vld [vmem:[%s2 + $0x1a0] sm:$0xff]
      %v575 = vld [vmem:[%s2 + $0x1a8] sm:$0xff]
      %v576 = vld [vmem:[%s2 + $0x1b0] sm:$0xff]
      %v577 = vld [vmem:[%s2 + $0x1b8] sm:$0xff]
      %v578 = vld [vmem:[%s2 + $0x1c0] sm:$0xff]
      %v579 = vld [vmem:[%s2 + $0x1c8] sm:$0xff]
      %v580 = vld [vmem:[%s2 + $0x1d0] sm:$0xff]
      %v581 = vld [vmem:[%s2 + $0x1d8] sm:$0xff]
      %v582 = vld [vmem:[%s2 + $0x1e0] sm:$0xff]
      %v583 = vld [vmem:[%s2 + $0x1e8] sm:$0xff]
      %v584 = vld [vmem:[%s2 + $0x1f0] sm:$0xff]
      %v585 = vld [vmem:[%s2 + $0x1f8] sm:$0xff]
      %v586 = vld [vmem:[%s2 + $0x200] sm:$0xff]
      %v587 = vld [vmem:[%s2 + $0x208] sm:$0xff]
      %v588 = vld [vmem:[%s2 + $0x210] sm:$0xff]
      %v589 = vld [vmem:[%s2 + $0x218] sm:$0xff]
      %v590 = vld [vmem:[%s2 + $0x220] sm:$0xff]
      %v591 = vld [vmem:[%s2 + $0x228] sm:$0xff]
      %v592 = vld [vmem:[%s2 + $0x230] sm:$0xff]
      %v593 = vld [vmem:[%s2 + $0x238] sm:$0xff]
      %v594 = vld [vmem:[%s2 + $0x240] sm:$0xff]
      %v595 = vld [vmem:[%s2 + $0x248] sm:$0xff]
      %v596 = vld [vmem:[%s2 + $0x250] sm:$0xff]
      %v597 = vld [vmem:[%s2 + $0x258] sm:$0xff]
      %v598 = vld [vmem:[%s2 + $0x260] sm:$0xff]
      %v599 = vld [vmem:[%s2 + $0x268] sm:$0xff]
      %v600 = vld [vmem:[%s2 + $0x270] sm:$0xff]
      %v601 = vld [vmem:[%s2 + $0x278] sm:$0xff]
      %v602 = vld [vmem:[%s2 + $0x280] sm:$0xff]
      %v603 = vld [vmem:[%s2 + $0x288] sm:$0xff]
      %v604 = vld [vmem:[%s2 + $0x290] sm:$0xff]
      %v605 = vld [vmem:[%s2 + $0x298] sm:$0xff]
      %v606 = vld [vmem:[%s2 + $0x2a0] sm:$0xff]
      %v607 = vld [vmem:[%s2 + $0x2a8] sm:$0xff]
      %v608 = vld [vmem:[%s2 + $0x2b0] sm:$0xff]
      %v609 = vld [vmem:[%s2 + $0x2b8] sm:$0xff]
      %v610 = vld [vmem:[%s2 + $0x2c0] sm:$0xff]
      %v611 = vld [vmem:[%s2 + $0x2c8] sm:$0xff]
      %v612 = vld [vmem:[%s2 + $0x2d0] sm:$0xff]
      %v613 = vld [vmem:[%s2 + $0x2d8] sm:$0xff]
      %v614 = vld [vmem:[%s2 + $0x2e0] sm:$0xff]
      %v615 = vld [vmem:[%s2 + $0x2e8] sm:$0xff]
      %v616 = vld [vmem:[%s2 + $0x2f0] sm:$0xff]
      %v617 = vld [vmem:[%s2 + $0x2f8] sm:$0xff]
      %v618 = vld [vmem:[%s2 + $0x300] sm:$0xff]
      %v619 = vld [vmem:[%s2 + $0x308] sm:$0xff]
      %v620 = vld [vmem:[%s2 + $0x310] sm:$0xff]
      %v621 = vld [vmem:[%s2 + $0x318] sm:$0xff]
      %v622 = vld [vmem:[%s2 + $0x320] sm:$0xff]
      %v623 = vld [vmem:[%s2 + $0x328] sm:$0xff]
      %v624 = vld [vmem:[%s2 + $0x330] sm:$0xff]
      %v625 = vld [vmem:[%s2 + $0x338] sm:$0xff]
      %v626 = vld [vmem:[%s2 + $0x340] sm:$0xff]
      %v627 = vld [vmem:[%s2 + $0x348] sm:$0xff]
      %v628 = vld [vmem:[%s2 + $0x350] sm:$0xff]
      %v629 = vld [vmem:[%s2 + $0x358] sm:$0xff]
      %v630 = vld [vmem:[%s2 + $0x360] sm:$0xff]
      %v631 = vld [vmem:[%s2 + $0x368] sm:$0xff]
      %v632 = vld [vmem:[%s2 + $0x370] sm:$0xff]
      %v633 = vld [vmem:[%s2 + $0x378] sm:$0xff]
      %v634 = vld [vmem:[%s2 + $0x380] sm:$0xff]
      %v635 = vld [vmem:[%s2 + $0x388] sm:$0xff]
      %v636 = vld [vmem:[%s2 + $0x390] sm:$0xff]
      %v637 = vld [vmem:[%s2 + $0x398] sm:$0xff]
      %v638 = vld [vmem:[%s2 + $0x3a0] sm:$0xff]
      %v639 = vld [vmem:[%s2 + $0x3a8] sm:$0xff]
      %v640 = vld [vmem:[%s2 + $0x3b0] sm:$0xff]
      %v641 = vld [vmem:[%s2 + $0x3b8] sm:$0xff]
      %v642 = vld [vmem:[%s2 + $0x3c0] sm:$0xff]
      %v643 = vld [vmem:[%s2 + $0x3c8] sm:$0xff]
      %v644 = vld [vmem:[%s2 + $0x3d0] sm:$0xff]
      %v645 = vld [vmem:[%s2 + $0x3d8] sm:$0xff]
      %v646 = vld [vmem:[%s2 + $0x3e0] sm:$0xff]
      %v647 = vld [vmem:[%s2 + $0x3e8] sm:$0xff]
      %v648 = vld [vmem:[%s2 + $0x3f0] sm:$0xff]
      %v649 = vld [vmem:[%s2 + $0x3f8] sm:$0xff]
      %v650 = vld [vmem:[%s3] sm:$0xf]
      %v652 = vlaneseq
      %v653 = vshrl.u32 %v652, 7
      %v654 = vsub.s32 0, %v653
      %v655 = vrot.slane %v650, %v654
      %v656 = vlaneseq
      %v657 = vshrl.u32 %v656, 7
      %v658 = vsub.s32 1, %v657
      %v659 = vrot.slane %v650, %v658
      %v660 = vlaneseq
      %v661 = vshrl.u32 %v660, 7
      %v662 = vsub.s32 2, %v661
      %v663 = vrot.slane %v650, %v662
      %v664 = vlaneseq
      %v665 = vshrl.u32 %v664, 7
      %v666 = vsub.s32 3, %v665
      %v667 = vrot.slane %v650, %v666
      %v800 = vunpack.c.l.b16 %v522
      %v801 = vunpack.c.h.b16 %v522
      %v802 = vunpack.c.l.b16 %v523
      %v803 = vunpack.c.h.b16 %v523
      %v804 = vunpack.c.l.b16 %v524
      %v805 = vunpack.c.h.b16 %v524
      %v806 = vunpack.c.l.b16 %v525
      %v807 = vunpack.c.h.b16 %v525
      %v808 = vunpack.c.l.b16 %v526
      %v809 = vunpack.c.h.b16 %v526
      %v810 = vunpack.c.l.b16 %v527
      %v811 = vunpack.c.h.b16 %v527
      %v812 = vunpack.c.l.b16 %v528
      %v813 = vunpack.c.h.b16 %v528
      %v814 = vunpack.c.l.b16 %v529
      %v815 = vunpack.c.h.b16 %v529
      %v816 = vunpack.c.l.b16 %v530
      %v817 = vunpack.c.h.b16 %v530
      %v818 = vunpack.c.l.b16 %v531
      %v819 = vunpack.c.h.b16 %v531
      %v820 = vunpack.c.l.b16 %v532
      %v821 = vunpack.c.h.b16 %v532
      %v822 = vunpack.c.l.b16 %v533
      %v823 = vunpack.c.h.b16 %v533
      %v824 = vunpack.c.l.b16 %v534
      %v825 = vunpack.c.h.b16 %v534
      %v826 = vunpack.c.l.b16 %v535
      %v827 = vunpack.c.h.b16 %v535
      %v828 = vunpack.c.l.b16 %v536
      %v829 = vunpack.c.h.b16 %v536
      %v830 = vunpack.c.l.b16 %v537
      %v831 = vunpack.c.h.b16 %v537
      %v832 = vunpack.c.l.b16 %v538
      %v833 = vunpack.c.h.b16 %v538
      %v834 = vunpack.c.l.b16 %v539
      %v835 = vunpack.c.h.b16 %v539
      %v836 = vunpack.c.l.b16 %v540
      %v837 = vunpack.c.h.b16 %v540
      %v838 = vunpack.c.l.b16 %v541
      %v839 = vunpack.c.h.b16 %v541
      %v840 = vunpack.c.l.b16 %v542
      %v841 = vunpack.c.h.b16 %v542
      %v842 = vunpack.c.l.b16 %v543
      %v843 = vunpack.c.h.b16 %v543
      %v844 = vunpack.c.l.b16 %v544
      %v845 = vunpack.c.h.b16 %v544
      %v846 = vunpack.c.l.b16 %v545
      %v847 = vunpack.c.h.b16 %v545
      %v848 = vunpack.c.l.b16 %v546
      %v849 = vunpack.c.h.b16 %v546
      %v850 = vunpack.c.l.b16 %v547
      %v851 = vunpack.c.h.b16 %v547
      %v852 = vunpack.c.l.b16 %v548
      %v853 = vunpack.c.h.b16 %v548
      %v854 = vunpack.c.l.b16 %v549
      %v855 = vunpack.c.h.b16 %v549
      %v856 = vunpack.c.l.b16 %v550
      %v857 = vunpack.c.h.b16 %v550
      %v858 = vunpack.c.l.b16 %v551
      %v859 = vunpack.c.h.b16 %v551
      %v860 = vunpack.c.l.b16 %v552
      %v861 = vunpack.c.h.b16 %v552
      %v862 = vunpack.c.l.b16 %v553
      %v863 = vunpack.c.h.b16 %v553
      %v864 = vunpack.c.l.b16 %v554
      %v865 = vunpack.c.h.b16 %v554
      %v866 = vunpack.c.l.b16 %v555
      %v867 = vunpack.c.h.b16 %v555
      %v868 = vunpack.c.l.b16 %v556
      %v869 = vunpack.c.h.b16 %v556
      %v870 = vunpack.c.l.b16 %v557
      %v871 = vunpack.c.h.b16 %v557
      %v872 = vunpack.c.l.b16 %v558
      %v873 = vunpack.c.h.b16 %v558
      %v874 = vunpack.c.l.b16 %v559
      %v875 = vunpack.c.h.b16 %v559
      %v876 = vunpack.c.l.b16 %v560
      %v877 = vunpack.c.h.b16 %v560
      %v878 = vunpack.c.l.b16 %v561
      %v879 = vunpack.c.h.b16 %v561
      %v880 = vunpack.c.l.b16 %v562
      %v881 = vunpack.c.h.b16 %v562
      %v882 = vunpack.c.l.b16 %v563
      %v883 = vunpack.c.h.b16 %v563
      %v884 = vunpack.c.l.b16 %v564
      %v885 = vunpack.c.h.b16 %v564
      %v886 = vunpack.c.l.b16 %v565
      %v887 = vunpack.c.h.b16 %v565
      %v888 = vunpack.c.l.b16 %v566
      %v889 = vunpack.c.h.b16 %v566
      %v890 = vunpack.c.l.b16 %v567
      %v891 = vunpack.c.h.b16 %v567
      %v892 = vunpack.c.l.b16 %v568
      %v893 = vunpack.c.h.b16 %v568
      %v894 = vunpack.c.l.b16 %v569
      %v895 = vunpack.c.h.b16 %v569
      %v896 = vunpack.c.l.b16 %v570
      %v897 = vunpack.c.h.b16 %v570
      %v898 = vunpack.c.l.b16 %v571
      %v899 = vunpack.c.h.b16 %v571
      %v900 = vunpack.c.l.b16 %v572
      %v901 = vunpack.c.h.b16 %v572
      %v902 = vunpack.c.l.b16 %v573
      %v903 = vunpack.c.h.b16 %v573
      %v904 = vunpack.c.l.b16 %v574
      %v905 = vunpack.c.h.b16 %v574
      %v906 = vunpack.c.l.b16 %v575
      %v907 = vunpack.c.h.b16 %v575
      %v908 = vunpack.c.l.b16 %v576
      %v909 = vunpack.c.h.b16 %v576
      %v910 = vunpack.c.l.b16 %v577
      %v911 = vunpack.c.h.b16 %v577
      %v912 = vunpack.c.l.b16 %v578
      %v913 = vunpack.c.h.b16 %v578
      %v914 = vunpack.c.l.b16 %v579
      %v915 = vunpack.c.h.b16 %v579
      %v916 = vunpack.c.l.b16 %v580
      %v917 = vunpack.c.h.b16 %v580
      %v918 = vunpack.c.l.b16 %v581
      %v919 = vunpack.c.h.b16 %v581
      %v920 = vunpack.c.l.b16 %v582
      %v921 = vunpack.c.h.b16 %v582
      %v922 = vunpack.c.l.b16 %v583
      %v923 = vunpack.c.h.b16 %v583
      %v924 = vunpack.c.l.b16 %v584
      %v925 = vunpack.c.h.b16 %v584
      %v926 = vunpack.c.l.b16 %v585
      %v927 = vunpack.c.h.b16 %v585
      %v928 = vunpack.c.l.b16 %v586
      %v929 = vunpack.c.h.b16 %v586
      %v930 = vunpack.c.l.b16 %v587
      %v931 = vunpack.c.h.b16 %v587
      %v932 = vunpack.c.l.b16 %v588
      %v933 = vunpack.c.h.b16 %v588
      %v934 = vunpack.c.l.b16 %v589
      %v935 = vunpack.c.h.b16 %v589
      %v936 = vunpack.c.l.b16 %v590
      %v937 = vunpack.c.h.b16 %v590
      %v938 = vunpack.c.l.b16 %v591
      %v939 = vunpack.c.h.b16 %v591
      %v940 = vunpack.c.l.b16 %v592
      %v941 = vunpack.c.h.b16 %v592
      %v942 = vunpack.c.l.b16 %v593
      %v943 = vunpack.c.h.b16 %v593
      %v944 = vunpack.c.l.b16 %v594
      %v945 = vunpack.c.h.b16 %v594
      %v946 = vunpack.c.l.b16 %v595
      %v947 = vunpack.c.h.b16 %v595
      %v948 = vunpack.c.l.b16 %v596
      %v949 = vunpack.c.h.b16 %v596
      %v950 = vunpack.c.l.b16 %v597
      %v951 = vunpack.c.h.b16 %v597
      %v952 = vunpack.c.l.b16 %v598
      %v953 = vunpack.c.h.b16 %v598
      %v954 = vunpack.c.l.b16 %v599
      %v955 = vunpack.c.h.b16 %v599
      %v956 = vunpack.c.l.b16 %v600
      %v957 = vunpack.c.h.b16 %v600
      %v958 = vunpack.c.l.b16 %v601
      %v959 = vunpack.c.h.b16 %v601
      %v960 = vunpack.c.l.b16 %v602
      %v961 = vunpack.c.h.b16 %v602
      %v962 = vunpack.c.l.b16 %v603
      %v963 = vunpack.c.h.b16 %v603
      %v964 = vunpack.c.l.b16 %v604
      %v965 = vunpack.c.h.b16 %v604
      %v966 = vunpack.c.l.b16 %v605
      %v967 = vunpack.c.h.b16 %v605
      %v968 = vunpack.c.l.b16 %v606
      %v969 = vunpack.c.h.b16 %v606
      %v970 = vunpack.c.l.b16 %v607
      %v971 = vunpack.c.h.b16 %v607
      %v972 = vunpack.c.l.b16 %v608
      %v973 = vunpack.c.h.b16 %v608
      %v974 = vunpack.c.l.b16 %v609
      %v975 = vunpack.c.h.b16 %v609
      %v976 = vunpack.c.l.b16 %v610
      %v977 = vunpack.c.h.b16 %v610
      %v978 = vunpack.c.l.b16 %v611
      %v979 = vunpack.c.h.b16 %v611
      %v980 = vunpack.c.l.b16 %v612
      %v981 = vunpack.c.h.b16 %v612
      %v982 = vunpack.c.l.b16 %v613
      %v983 = vunpack.c.h.b16 %v613
      %v984 = vunpack.c.l.b16 %v614
      %v985 = vunpack.c.h.b16 %v614
      %v986 = vunpack.c.l.b16 %v615
      %v987 = vunpack.c.h.b16 %v615
      %v988 = vunpack.c.l.b16 %v616
      %v989 = vunpack.c.h.b16 %v616
      %v990 = vunpack.c.l.b16 %v617
      %v991 = vunpack.c.h.b16 %v617
      %v992 = vunpack.c.l.b16 %v618
      %v993 = vunpack.c.h.b16 %v618
      %v994 = vunpack.c.l.b16 %v619
      %v995 = vunpack.c.h.b16 %v619
      %v996 = vunpack.c.l.b16 %v620
      %v997 = vunpack.c.h.b16 %v620
      %v998 = vunpack.c.l.b16 %v621
      %v999 = vunpack.c.h.b16 %v621
      %v1000 = vunpack.c.l.b16 %v622
      %v1001 = vunpack.c.h.b16 %v622
      %v1002 = vunpack.c.l.b16 %v623
      %v1003 = vunpack.c.h.b16 %v623
      %v1004 = vunpack.c.l.b16 %v624
      %v1005 = vunpack.c.h.b16 %v624
      %v1006 = vunpack.c.l.b16 %v625
      %v1007 = vunpack.c.h.b16 %v625
      %v1008 = vunpack.c.l.b16 %v626
      %v1009 = vunpack.c.h.b16 %v626
      %v1010 = vunpack.c.l.b16 %v627
      %v1011 = vunpack.c.h.b16 %v627
      %v1012 = vunpack.c.l.b16 %v628
      %v1013 = vunpack.c.h.b16 %v628
      %v1014 = vunpack.c.l.b16 %v629
      %v1015 = vunpack.c.h.b16 %v629
      %v1016 = vunpack.c.l.b16 %v630
      %v1017 = vunpack.c.h.b16 %v630
      %v1018 = vunpack.c.l.b16 %v631
      %v1019 = vunpack.c.h.b16 %v631
      %v1020 = vunpack.c.l.b16 %v632
      %v1021 = vunpack.c.h.b16 %v632
      %v1022 = vunpack.c.l.b16 %v633
      %v1023 = vunpack.c.h.b16 %v633
      %v1024 = vunpack.c.l.b16 %v634
      %v1025 = vunpack.c.h.b16 %v634
      %v1026 = vunpack.c.l.b16 %v635
      %v1027 = vunpack.c.h.b16 %v635
      %v1028 = vunpack.c.l.b16 %v636
      %v1029 = vunpack.c.h.b16 %v636
      %v1030 = vunpack.c.l.b16 %v637
      %v1031 = vunpack.c.h.b16 %v637
      %v1032 = vunpack.c.l.b16 %v638
      %v1033 = vunpack.c.h.b16 %v638
      %v1034 = vunpack.c.l.b16 %v639
      %v1035 = vunpack.c.h.b16 %v639
      %v1036 = vunpack.c.l.b16 %v640
      %v1037 = vunpack.c.h.b16 %v640
      %v1038 = vunpack.c.l.b16 %v641
      %v1039 = vunpack.c.h.b16 %v641
      %v1040 = vunpack.c.l.b16 %v642
      %v1041 = vunpack.c.h.b16 %v642
      %v1042 = vunpack.c.l.b16 %v643
      %v1043 = vunpack.c.h.b16 %v643
      %v1044 = vunpack.c.l.b16 %v644
      %v1045 = vunpack.c.h.b16 %v644
      %v1046 = vunpack.c.l.b16 %v645
      %v1047 = vunpack.c.h.b16 %v645
      %v1048 = vunpack.c.l.b16 %v646
      %v1049 = vunpack.c.h.b16 %v646
      %v1050 = vunpack.c.l.b16 %v647
      %v1051 = vunpack.c.h.b16 %v647
      %v1052 = vunpack.c.l.b16 %v648
      %v1053 = vunpack.c.h.b16 %v648
      %v1054 = vunpack.c.l.b16 %v649
      %v1055 = vunpack.c.h.b16 %v649
      %v1056 = vpack.c.b16 %v804, %v800
      %v1057 = vpack.c.b16 %v805, %v801
      %v1058 = vpack.c.b16 %v806, %v802
      %v1059 = vpack.c.b16 %v807, %v803
      %v1060 = vpack.c.b16 %v812, %v808
      %v1061 = vpack.c.b16 %v813, %v809
      %v1062 = vpack.c.b16 %v814, %v810
      %v1063 = vpack.c.b16 %v815, %v811
      %v1064 = vpack.c.b16 %v820, %v816
      %v1065 = vpack.c.b16 %v821, %v817
      %v1066 = vpack.c.b16 %v822, %v818
      %v1067 = vpack.c.b16 %v823, %v819
      %v1068 = vpack.c.b16 %v828, %v824
      %v1069 = vpack.c.b16 %v829, %v825
      %v1070 = vpack.c.b16 %v830, %v826
      %v1071 = vpack.c.b16 %v831, %v827
      %v1072 = vpack.c.b16 %v836, %v832
      %v1073 = vpack.c.b16 %v837, %v833
      %v1074 = vpack.c.b16 %v838, %v834
      %v1075 = vpack.c.b16 %v839, %v835
      %v1076 = vpack.c.b16 %v844, %v840
      %v1077 = vpack.c.b16 %v845, %v841
      %v1078 = vpack.c.b16 %v846, %v842
      %v1079 = vpack.c.b16 %v847, %v843
      %v1080 = vpack.c.b16 %v852, %v848
      %v1081 = vpack.c.b16 %v853, %v849
      %v1082 = vpack.c.b16 %v854, %v850
      %v1083 = vpack.c.b16 %v855, %v851
      %v1084 = vpack.c.b16 %v860, %v856
      %v1085 = vpack.c.b16 %v861, %v857
      %v1086 = vpack.c.b16 %v862, %v858
      %v1087 = vpack.c.b16 %v863, %v859
      %v1088 = vpack.c.b16 %v868, %v864
      %v1089 = vpack.c.b16 %v869, %v865
      %v1090 = vpack.c.b16 %v870, %v866
      %v1091 = vpack.c.b16 %v871, %v867
      %v1092 = vpack.c.b16 %v876, %v872
      %v1093 = vpack.c.b16 %v877, %v873
      %v1094 = vpack.c.b16 %v878, %v874
      %v1095 = vpack.c.b16 %v879, %v875
      %v1096 = vpack.c.b16 %v884, %v880
      %v1097 = vpack.c.b16 %v885, %v881
      %v1098 = vpack.c.b16 %v886, %v882
      %v1099 = vpack.c.b16 %v887, %v883
      %v1100 = vpack.c.b16 %v892, %v888
      %v1101 = vpack.c.b16 %v893, %v889
      %v1102 = vpack.c.b16 %v894, %v890
      %v1103 = vpack.c.b16 %v895, %v891
      %v1104 = vpack.c.b16 %v900, %v896
      %v1105 = vpack.c.b16 %v901, %v897
      %v1106 = vpack.c.b16 %v902, %v898
      %v1107 = vpack.c.b16 %v903, %v899
      %v1108 = vpack.c.b16 %v908, %v904
      %v1109 = vpack.c.b16 %v909, %v905
      %v1110 = vpack.c.b16 %v910, %v906
      %v1111 = vpack.c.b16 %v911, %v907
      %v1112 = vpack.c.b16 %v916, %v912
      %v1113 = vpack.c.b16 %v917, %v913
      %v1114 = vpack.c.b16 %v918, %v914
      %v1115 = vpack.c.b16 %v919, %v915
      %v1116 = vpack.c.b16 %v924, %v920
      %v1117 = vpack.c.b16 %v925, %v921
      %v1118 = vpack.c.b16 %v926, %v922
      %v1119 = vpack.c.b16 %v927, %v923
      %v1120 = vpack.c.b16 %v932, %v928
      %v1121 = vpack.c.b16 %v933, %v929
      %v1122 = vpack.c.b16 %v934, %v930
      %v1123 = vpack.c.b16 %v935, %v931
      %v1124 = vpack.c.b16 %v940, %v936
      %v1125 = vpack.c.b16 %v941, %v937
      %v1126 = vpack.c.b16 %v942, %v938
      %v1127 = vpack.c.b16 %v943, %v939
      %v1128 = vpack.c.b16 %v948, %v944
      %v1129 = vpack.c.b16 %v949, %v945
      %v1130 = vpack.c.b16 %v950, %v946
      %v1131 = vpack.c.b16 %v951, %v947
      %v1132 = vpack.c.b16 %v956, %v952
      %v1133 = vpack.c.b16 %v957, %v953
      %v1134 = vpack.c.b16 %v958, %v954
      %v1135 = vpack.c.b16 %v959, %v955
      %v1136 = vpack.c.b16 %v964, %v960
      %v1137 = vpack.c.b16 %v965, %v961
      %v1138 = vpack.c.b16 %v966, %v962
      %v1139 = vpack.c.b16 %v967, %v963
      %v1140 = vpack.c.b16 %v972, %v968
      %v1141 = vpack.c.b16 %v973, %v969
      %v1142 = vpack.c.b16 %v974, %v970
      %v1143 = vpack.c.b16 %v975, %v971
      %v1144 = vpack.c.b16 %v980, %v976
      %v1145 = vpack.c.b16 %v981, %v977
      %v1146 = vpack.c.b16 %v982, %v978
      %v1147 = vpack.c.b16 %v983, %v979
      %v1148 = vpack.c.b16 %v988, %v984
      %v1149 = vpack.c.b16 %v989, %v985
      %v1150 = vpack.c.b16 %v990, %v986
      %v1151 = vpack.c.b16 %v991, %v987
      %v1152 = vpack.c.b16 %v996, %v992
      %v1153 = vpack.c.b16 %v997, %v993
      %v1154 = vpack.c.b16 %v998, %v994
      %v1155 = vpack.c.b16 %v999, %v995
      %v1156 = vpack.c.b16 %v1004, %v1000
      %v1157 = vpack.c.b16 %v1005, %v1001
      %v1158 = vpack.c.b16 %v1006, %v1002
      %v1159 = vpack.c.b16 %v1007, %v1003
      %v1160 = vpack.c.b16 %v1012, %v1008
      %v1161 = vpack.c.b16 %v1013, %v1009
      %v1162 = vpack.c.b16 %v1014, %v1010
      %v1163 = vpack.c.b16 %v1015, %v1011
      %v1164 = vpack.c.b16 %v1020, %v1016
      %v1165 = vpack.c.b16 %v1021, %v1017
      %v1166 = vpack.c.b16 %v1022, %v1018
      %v1167 = vpack.c.b16 %v1023, %v1019
      %v1168 = vpack.c.b16 %v1028, %v1024
      %v1169 = vpack.c.b16 %v1029, %v1025
      %v1170 = vpack.c.b16 %v1030, %v1026
      %v1171 = vpack.c.b16 %v1031, %v1027
      %v1172 = vpack.c.b16 %v1036, %v1032
      %v1173 = vpack.c.b16 %v1037, %v1033
      %v1174 = vpack.c.b16 %v1038, %v1034
      %v1175 = vpack.c.b16 %v1039, %v1035
      %v1176 = vpack.c.b16 %v1044, %v1040
      %v1177 = vpack.c.b16 %v1045, %v1041
      %v1178 = vpack.c.b16 %v1046, %v1042
      %v1179 = vpack.c.b16 %v1047, %v1043
      %v1180 = vpack.c.b16 %v1052, %v1048
      %v1181 = vpack.c.b16 %v1053, %v1049
      %v1182 = vpack.c.b16 %v1054, %v1050
      %v1183 = vpack.c.b16 %v1055, %v1051
      %1312 = vmatprep.subr.bf16.mxu0 %v1085
      %1313 = vmatpush1.bf16.msra.mxu0 %v1084
      %1314 = vmatprep.subr.bf16.mxu0 %v1081
      %1315 = vmatpush1.bf16.msra.mxu0 %v1080
      %1316 = vmatprep.subr.bf16.mxu0 %v1077
      %1317 = vmatpush1.bf16.msra.mxu0 %v1076
      %1318 = vmatprep.subr.bf16.mxu0 %v1073
      %1319 = vmatpush1.bf16.msra.mxu0 %v1072
      %1320 = vmatprep.subr.bf16.mxu0 %v1069
      %1321 = vmatpush1.bf16.msra.mxu0 %v1068
      %1322 = vmatprep.subr.bf16.mxu0 %v1065
      %1323 = vmatpush1.bf16.msra.mxu0 %v1064
      %1324 = vmatprep.subr.bf16.mxu0 %v1061
      %1325 = vmatpush1.bf16.msra.mxu0 %v1060
      %1326 = vmatprep.subr.bf16.mxu0 %v1057
      %1327 = vmatpush1.bf16.msra.mxu0 %v1056
      %1328 = vmatprep.subr.bf16.mxu0 %v1117
      %1329 = vmatpush2.bf16.msra.mxu0 %v1116
      %1330 = vmatprep.subr.bf16.mxu0 %v1113
      %1331 = vmatpush2.bf16.msra.mxu0 %v1112
      %1332 = vmatprep.subr.bf16.mxu0 %v1109
      %1333 = vmatpush2.bf16.msra.mxu0 %v1108
      %1334 = vmatprep.subr.bf16.mxu0 %v1105
      %1335 = vmatpush2.bf16.msra.mxu0 %v1104
      %1336 = vmatprep.subr.bf16.mxu0 %v1101
      %1337 = vmatpush2.bf16.msra.mxu0 %v1100
      %1338 = vmatprep.subr.bf16.mxu0 %v1097
      %1339 = vmatpush2.bf16.msra.mxu0 %v1096
      %1340 = vmatprep.subr.bf16.mxu0 %v1093
      %1341 = vmatpush2.bf16.msra.mxu0 %v1092
      %1342 = vmatprep.subr.bf16.mxu0 %v1089
      %1343 = vmatpush2.bf16.msra.mxu0 %v1088
      %1344 = vmatprep.mubr.bf16.mxu0 %v519
      %1345 = vmatmul.mubr.bf16.gmra.mxu0 %v518
      %v1346 = vpop.f32.mrf.mxu0
      %v1347 = vadd.f32 %v655, %v1346
      %v1348 = vpop.f32.mrf.mxu0
      %v1349 = vadd.f32 %v659, %v1348
      %v1350 = vpop.f32.mrf.mxu0
      %v1351 = vadd.f32 %v655, %v1350
      %v1352 = vpop.f32.mrf.mxu0
      %v1353 = vadd.f32 %v659, %v1352
      %1354 = vdwg.mxu0
      %1355 = vmatprep.subr.bf16.mxu0 %v1149
      %1356 = vmatpush1.bf16.msra.mxu0 %v1148
      %1357 = vmatprep.subr.bf16.mxu0 %v1145
      %1358 = vmatpush1.bf16.msra.mxu0 %v1144
      %1359 = vmatprep.subr.bf16.mxu0 %v1141
      %1360 = vmatpush1.bf16.msra.mxu0 %v1140
      %1361 = vmatprep.subr.bf16.mxu0 %v1137
      %1362 = vmatpush1.bf16.msra.mxu0 %v1136
      %1363 = vmatprep.subr.bf16.mxu0 %v1133
      %1364 = vmatpush1.bf16.msra.mxu0 %v1132
      %1365 = vmatprep.subr.bf16.mxu0 %v1129
      %1366 = vmatpush1.bf16.msra.mxu0 %v1128
      %1367 = vmatprep.subr.bf16.mxu0 %v1125
      %1368 = vmatpush1.bf16.msra.mxu0 %v1124
      %1369 = vmatprep.subr.bf16.mxu0 %v1121
      %1370 = vmatpush1.bf16.msra.mxu0 %v1120
      %1371 = vmatprep.subr.bf16.mxu0 %v1181
      %1372 = vmatpush2.bf16.msra.mxu0 %v1180
      %1373 = vmatprep.subr.bf16.mxu0 %v1177
      %1374 = vmatpush2.bf16.msra.mxu0 %v1176
      %1375 = vmatprep.subr.bf16.mxu0 %v1173
      %1376 = vmatpush2.bf16.msra.mxu0 %v1172
      %1377 = vmatprep.subr.bf16.mxu0 %v1169
      %1378 = vmatpush2.bf16.msra.mxu0 %v1168
      %1379 = vmatprep.subr.bf16.mxu0 %v1165
      %1380 = vmatpush2.bf16.msra.mxu0 %v1164
      %1381 = vmatprep.subr.bf16.mxu0 %v1161
      %1382 = vmatpush2.bf16.msra.mxu0 %v1160
      %1383 = vmatprep.subr.bf16.mxu0 %v1157
      %1384 = vmatpush2.bf16.msra.mxu0 %v1156
      %1385 = vmatprep.subr.bf16.mxu0 %v1153
      %1386 = vmatpush2.bf16.msra.mxu0 %v1152
      %1387 = vmatprep.mubr.bf16.mxu0 %v521
      %1388 = vmatmul.mubr.bf16.gmra.mxu0 %v520
      %v1389 = vpop.f32.mrf.mxu0
      %v1390 = vadd.f32 %v1347, %v1389
      %v1391 = vpop.f32.mrf.mxu0
      %v1392 = vadd.f32 %v1349, %v1391
      %v1393 = vpop.f32.mrf.mxu0
      %v1394 = vadd.f32 %v1351, %v1393
      %v1395 = vpop.f32.mrf.mxu0
      %v1396 = vadd.f32 %v1353, %v1395
      %1397 = vdwg.mxu0
      %1398 = vmatprep.subr.bf16.mxu0 %v1087
      %1399 = vmatpush1.bf16.msra.mxu0 %v1086
      %1400 = vmatprep.subr.bf16.mxu0 %v1083
      %1401 = vmatpush1.bf16.msra.mxu0 %v1082
      %1402 = vmatprep.subr.bf16.mxu0 %v1079
      %1403 = vmatpush1.bf16.msra.mxu0 %v1078
      %1404 = vmatprep.subr.bf16.mxu0 %v1075
      %1405 = vmatpush1.bf16.msra.mxu0 %v1074
      %1406 = vmatprep.subr.bf16.mxu0 %v1071
      %1407 = vmatpush1.bf16.msra.mxu0 %v1070
      %1408 = vmatprep.subr.bf16.mxu0 %v1067
      %1409 = vmatpush1.bf16.msra.mxu0 %v1066
      %1410 = vmatprep.subr.bf16.mxu0 %v1063
      %1411 = vmatpush1.bf16.msra.mxu0 %v1062
      %1412 = vmatprep.subr.bf16.mxu0 %v1059
      %1413 = vmatpush1.bf16.msra.mxu0 %v1058
      %1414 = vmatprep.subr.bf16.mxu0 %v1119
      %1415 = vmatpush2.bf16.msra.mxu0 %v1118
      %1416 = vmatprep.subr.bf16.mxu0 %v1115
      %1417 = vmatpush2.bf16.msra.mxu0 %v1114
      %1418 = vmatprep.subr.bf16.mxu0 %v1111
      %1419 = vmatpush2.bf16.msra.mxu0 %v1110
      %1420 = vmatprep.subr.bf16.mxu0 %v1107
      %1421 = vmatpush2.bf16.msra.mxu0 %v1106
      %1422 = vmatprep.subr.bf16.mxu0 %v1103
      %1423 = vmatpush2.bf16.msra.mxu0 %v1102
      %1424 = vmatprep.subr.bf16.mxu0 %v1099
      %1425 = vmatpush2.bf16.msra.mxu0 %v1098
      %1426 = vmatprep.subr.bf16.mxu0 %v1095
      %1427 = vmatpush2.bf16.msra.mxu0 %v1094
      %1428 = vmatprep.subr.bf16.mxu0 %v1091
      %1429 = vmatpush2.bf16.msra.mxu0 %v1090
      %1430 = vmatprep.mubr.bf16.mxu0 %v519
      %1431 = vmatmul.mubr.bf16.gmra.mxu0 %v518
      %v1432 = vpop.f32.mrf.mxu0
      %v1433 = vadd.f32 %v663, %v1432
      %v1434 = vpop.f32.mrf.mxu0
      %v1435 = vadd.f32 %v667, %v1434
      %v1436 = vpop.f32.mrf.mxu0
      %v1437 = vadd.f32 %v663, %v1436
      %v1438 = vpop.f32.mrf.mxu0
      %v1439 = vadd.f32 %v667, %v1438
      %1440 = vdwg.mxu0
      %1441 = vmatprep.subr.bf16.mxu0 %v1151
      %1442 = vmatpush1.bf16.msra.mxu0 %v1150
      %1443 = vmatprep.subr.bf16.mxu0 %v1147
      %1444 = vmatpush1.bf16.msra.mxu0 %v1146
      %1445 = vmatprep.subr.bf16.mxu0 %v1143
      %1446 = vmatpush1.bf16.msra.mxu0 %v1142
      %1447 = vmatprep.subr.bf16.mxu0 %v1139
      %1448 = vmatpush1.bf16.msra.mxu0 %v1138
      %1449 = vmatprep.subr.bf16.mxu0 %v1135
      %1450 = vmatpush1.bf16.msra.mxu0 %v1134
      %1451 = vmatprep.subr.bf16.mxu0 %v1131
      %1452 = vmatpush1.bf16.msra.mxu0 %v1130
      %1453 = vmatprep.subr.bf16.mxu0 %v1127
      %1454 = vmatpush1.bf16.msra.mxu0 %v1126
      %1455 = vmatprep.subr.bf16.mxu0 %v1123
      %1456 = vmatpush1.bf16.msra.mxu0 %v1122
      %1457 = vmatprep.subr.bf16.mxu0 %v1183
      %1458 = vmatpush2.bf16.msra.mxu0 %v1182
      %1459 = vmatprep.subr.bf16.mxu0 %v1179
      %1460 = vmatpush2.bf16.msra.mxu0 %v1178
      %1461 = vmatprep.subr.bf16.mxu0 %v1175
      %1462 = vmatpush2.bf16.msra.mxu0 %v1174
      %1463 = vmatprep.subr.bf16.mxu0 %v1171
      %1464 = vmatpush2.bf16.msra.mxu0 %v1170
      %1465 = vmatprep.subr.bf16.mxu0 %v1167
      %1466 = vmatpush2.bf16.msra.mxu0 %v1166
      %1467 = vmatprep.subr.bf16.mxu0 %v1163
      %1468 = vmatpush2.bf16.msra.mxu0 %v1162
      %1469 = vmatprep.subr.bf16.mxu0 %v1159
      %1470 = vmatpush2.bf16.msra.mxu0 %v1158
      %1471 = vmatprep.subr.bf16.mxu0 %v1155
      %1472 = vmatpush2.bf16.msra.mxu0 %v1154
      %1473 = vmatprep.mubr.bf16.mxu0 %v521
      %1474 = vmatmul.mubr.bf16.gmra.mxu0 %v520
      %v1475 = vpop.f32.mrf.mxu0
      %v1476 = vadd.f32 %v1433, %v1475
      %v1477 = vpop.f32.mrf.mxu0
      %v1478 = vadd.f32 %v1435, %v1477
      %v1479 = vpop.f32.mrf.mxu0
      %v1480 = vadd.f32 %v1437, %v1479
      %v1481 = vpop.f32.mrf.mxu0
      %v1482 = vadd.f32 %v1439, %v1481
      %1483 = vdwg.mxu0
      %v1484 = vmax.f32 %v1390, 0.0
      %v1485 = vmax.f32 %v1392, 0.0
      %v1486 = vmax.f32 %v1476, 0.0
      %v1487 = vmax.f32 %v1478, 0.0
      %v1488 = vmax.f32 %v1394, 0.0
      %v1489 = vmax.f32 %v1396, 0.0
      %v1490 = vmax.f32 %v1480, 0.0
      %v1491 = vmax.f32 %v1482, 0.0
      %v1492 = vpack.c.bf16 %v1488, %v1484
      %v1493 = vpack.c.bf16 %v1489, %v1485
      %v1494 = vpack.c.bf16 %v1490, %v1486
      %v1495 = vpack.c.bf16 %v1491, %v1487
      %v1496 = vld [vmem:[%s4] sm:$0xf]
      %v1497 = vld [vmem:[%s4 + $0x4] sm:$0xf]
      %v1498 = vld [vmem:[%s4 + $0x8] sm:$0xf]
      %v1499 = vld [vmem:[%s4 + $0xc] sm:$0xf]
      %v1500 = vld [vmem:[%s4 + $0x10] sm:$0xf]
      %v1501 = vld [vmem:[%s4 + $0x14] sm:$0xf]
      %v1502 = vld [vmem:[%s4 + $0x18] sm:$0xf]
      %v1503 = vld [vmem:[%s4 + $0x1c] sm:$0xf]
      %v1504 = vld [vmem:[%s4 + $0x20] sm:$0xf]
      %v1505 = vld [vmem:[%s4 + $0x24] sm:$0xf]
      %v1506 = vld [vmem:[%s4 + $0x28] sm:$0xf]
      %v1507 = vld [vmem:[%s4 + $0x2c] sm:$0xf]
      %v1508 = vld [vmem:[%s4 + $0x30] sm:$0xf]
      %v1509 = vld [vmem:[%s4 + $0x34] sm:$0xf]
      %v1510 = vld [vmem:[%s4 + $0x38] sm:$0xf]
      %v1511 = vld [vmem:[%s4 + $0x3c] sm:$0xf]
      %v1512 = vld [vmem:[%s4 + $0x40] sm:$0xf]
      %v1513 = vld [vmem:[%s4 + $0x44] sm:$0xf]
      %v1514 = vld [vmem:[%s4 + $0x48] sm:$0xf]
      %v1515 = vld [vmem:[%s4 + $0x4c] sm:$0xf]
      %v1516 = vld [vmem:[%s4 + $0x50] sm:$0xf]
      %v1517 = vld [vmem:[%s4 + $0x54] sm:$0xf]
      %v1518 = vld [vmem:[%s4 + $0x58] sm:$0xf]
      %v1519 = vld [vmem:[%s4 + $0x5c] sm:$0xf]
      %v1520 = vld [vmem:[%s4 + $0x60] sm:$0xf]
      %v1521 = vld [vmem:[%s4 + $0x64] sm:$0xf]
      %v1522 = vld [vmem:[%s4 + $0x68] sm:$0xf]
      %v1523 = vld [vmem:[%s4 + $0x6c] sm:$0xf]
      %v1524 = vld [vmem:[%s4 + $0x70] sm:$0xf]
      %v1525 = vld [vmem:[%s4 + $0x74] sm:$0xf]
      %v1526 = vld [vmem:[%s4 + $0x78] sm:$0xf]
      %v1527 = vld [vmem:[%s4 + $0x7c] sm:$0xf]
      %v1528 = vld [vmem:[%s4 + $0x80] sm:$0xf]
      %v1529 = vld [vmem:[%s4 + $0x84] sm:$0xf]
      %v1530 = vld [vmem:[%s4 + $0x88] sm:$0xf]
      %v1531 = vld [vmem:[%s4 + $0x8c] sm:$0xf]
      %v1532 = vld [vmem:[%s4 + $0x90] sm:$0xf]
      %v1533 = vld [vmem:[%s4 + $0x94] sm:$0xf]
      %v1534 = vld [vmem:[%s4 + $0x98] sm:$0xf]
      %v1535 = vld [vmem:[%s4 + $0x9c] sm:$0xf]
      %v1536 = vld [vmem:[%s4 + $0xa0] sm:$0xf]
      %v1537 = vld [vmem:[%s4 + $0xa4] sm:$0xf]
      %v1538 = vld [vmem:[%s4 + $0xa8] sm:$0xf]
      %v1539 = vld [vmem:[%s4 + $0xac] sm:$0xf]
      %v1540 = vld [vmem:[%s4 + $0xb0] sm:$0xf]
      %v1541 = vld [vmem:[%s4 + $0xb4] sm:$0xf]
      %v1542 = vld [vmem:[%s4 + $0xb8] sm:$0xf]
      %v1543 = vld [vmem:[%s4 + $0xbc] sm:$0xf]
      %v1544 = vld [vmem:[%s4 + $0xc0] sm:$0xf]
      %v1545 = vld [vmem:[%s4 + $0xc4] sm:$0xf]
      %v1546 = vld [vmem:[%s4 + $0xc8] sm:$0xf]
      %v1547 = vld [vmem:[%s4 + $0xcc] sm:$0xf]
      %v1548 = vld [vmem:[%s4 + $0xd0] sm:$0xf]
      %v1549 = vld [vmem:[%s4 + $0xd4] sm:$0xf]
      %v1550 = vld [vmem:[%s4 + $0xd8] sm:$0xf]
      %v1551 = vld [vmem:[%s4 + $0xdc] sm:$0xf]
      %v1552 = vld [vmem:[%s4 + $0xe0] sm:$0xf]
      %v1553 = vld [vmem:[%s4 + $0xe4] sm:$0xf]
      %v1554 = vld [vmem:[%s4 + $0xe8] sm:$0xf]
      %v1555 = vld [vmem:[%s4 + $0xec] sm:$0xf]
      %v1556 = vld [vmem:[%s4 + $0xf0] sm:$0xf]
      %v1557 = vld [vmem:[%s4 + $0xf4] sm:$0xf]
      %v1558 = vld [vmem:[%s4 + $0xf8] sm:$0xf]
      %v1559 = vld [vmem:[%s4 + $0xfc] sm:$0xf]
      %v1560 = vld [vmem:[%s5] sm:$0x1]
      %v1562 = vlaneseq
      %v1563 = vshrl.u32 %v1562, 7
      %v1564 = vsub.s32 0, %v1563
      %v1565 = vrot.slane %v1560, %v1564
      %v1631 = vunpack.c.l.b16 %v1496
      %v1632 = vunpack.c.l.b16 %v1497
      %v1633 = vunpack.c.l.b16 %v1498
      %v1634 = vunpack.c.l.b16 %v1499
      %v1635 = vunpack.c.l.b16 %v1500
      %v1636 = vunpack.c.l.b16 %v1501
      %v1637 = vunpack.c.l.b16 %v1502
      %v1638 = vunpack.c.l.b16 %v1503
      %v1639 = vunpack.c.l.b16 %v1504
      %v1640 = vunpack.c.l.b16 %v1505
      %v1641 = vunpack.c.l.b16 %v1506
      %v1642 = vunpack.c.l.b16 %v1507
      %v1643 = vunpack.c.l.b16 %v1508
      %v1644 = vunpack.c.l.b16 %v1509
      %v1645 = vunpack.c.l.b16 %v1510
      %v1646 = vunpack.c.l.b16 %v1511
      %v1647 = vunpack.c.l.b16 %v1512
      %v1648 = vunpack.c.l.b16 %v1513
      %v1649 = vunpack.c.l.b16 %v1514
      %v1650 = vunpack.c.l.b16 %v1515
      %v1651 = vunpack.c.l.b16 %v1516
      %v1652 = vunpack.c.l.b16 %v1517
      %v1653 = vunpack.c.l.b16 %v1518
      %v1654 = vunpack.c.l.b16 %v1519
      %v1655 = vunpack.c.l.b16 %v1520
      %v1656 = vunpack.c.l.b16 %v1521
      %v1657 = vunpack.c.l.b16 %v1522
      %v1658 = vunpack.c.l.b16 %v1523
      %v1659 = vunpack.c.l.b16 %v1524
      %v1660 = vunpack.c.l.b16 %v1525
      %v1661 = vunpack.c.l.b16 %v1526
      %v1662 = vunpack.c.l.b16 %v1527
      %v1663 = vunpack.c.l.b16 %v1528
      %v1664 = vunpack.c.l.b16 %v1529
      %v1665 = vunpack.c.l.b16 %v1530
      %v1666 = vunpack.c.l.b16 %v1531
      %v1667 = vunpack.c.l.b16 %v1532
      %v1668 = vunpack.c.l.b16 %v1533
      %v1669 = vunpack.c.l.b16 %v1534
      %v1670 = vunpack.c.l.b16 %v1535
      %v1671 = vunpack.c.l.b16 %v1536
      %v1672 = vunpack.c.l.b16 %v1537
      %v1673 = vunpack.c.l.b16 %v1538
      %v1674 = vunpack.c.l.b16 %v1539
      %v1675 = vunpack.c.l.b16 %v1540
      %v1676 = vunpack.c.l.b16 %v1541
      %v1677 = vunpack.c.l.b16 %v1542
      %v1678 = vunpack.c.l.b16 %v1543
      %v1679 = vunpack.c.l.b16 %v1544
      %v1680 = vunpack.c.l.b16 %v1545
      %v1681 = vunpack.c.l.b16 %v1546
      %v1682 = vunpack.c.l.b16 %v1547
      %v1683 = vunpack.c.l.b16 %v1548
      %v1684 = vunpack.c.l.b16 %v1549
      %v1685 = vunpack.c.l.b16 %v1550
      %v1686 = vunpack.c.l.b16 %v1551
      %v1687 = vunpack.c.l.b16 %v1552
      %v1688 = vunpack.c.l.b16 %v1553
      %v1689 = vunpack.c.l.b16 %v1554
      %v1690 = vunpack.c.l.b16 %v1555
      %v1691 = vunpack.c.l.b16 %v1556
      %v1692 = vunpack.c.l.b16 %v1557
      %v1693 = vunpack.c.l.b16 %v1558
      %v1694 = vunpack.c.l.b16 %v1559
      %v1695 = vpack.c.b16 %v1632, %v1631
      %v1696 = vpack.c.b16 %v1634, %v1633
      %v1697 = vpack.c.b16 %v1636, %v1635
      %v1698 = vpack.c.b16 %v1638, %v1637
      %v1699 = vpack.c.b16 %v1640, %v1639
      %v1700 = vpack.c.b16 %v1642, %v1641
      %v1701 = vpack.c.b16 %v1644, %v1643
      %v1702 = vpack.c.b16 %v1646, %v1645
      %v1703 = vpack.c.b16 %v1648, %v1647
      %v1704 = vpack.c.b16 %v1650, %v1649
      %v1705 = vpack.c.b16 %v1652, %v1651
      %v1706 = vpack.c.b16 %v1654, %v1653
      %v1707 = vpack.c.b16 %v1656, %v1655
      %v1708 = vpack.c.b16 %v1658, %v1657
      %v1709 = vpack.c.b16 %v1660, %v1659
      %v1710 = vpack.c.b16 %v1662, %v1661
      %v1711 = vpack.c.b16 %v1664, %v1663
      %v1712 = vpack.c.b16 %v1666, %v1665
      %v1713 = vpack.c.b16 %v1668, %v1667
      %v1714 = vpack.c.b16 %v1670, %v1669
      %v1715 = vpack.c.b16 %v1672, %v1671
      %v1716 = vpack.c.b16 %v1674, %v1673
      %v1717 = vpack.c.b16 %v1676, %v1675
      %v1718 = vpack.c.b16 %v1678, %v1677
      %v1719 = vpack.c.b16 %v1680, %v1679
      %v1720 = vpack.c.b16 %v1682, %v1681
      %v1721 = vpack.c.b16 %v1684, %v1683
      %v1722 = vpack.c.b16 %v1686, %v1685
      %v1723 = vpack.c.b16 %v1688, %v1687
      %v1724 = vpack.c.b16 %v1690, %v1689
      %v1725 = vpack.c.b16 %v1692, %v1691
      %v1726 = vpack.c.b16 %v1694, %v1693
      %1759 = vmatprep.subr.bf16.mxu0 0
      %1760 = vmatpush1.bf16.msra.mxu0 %v1702
      %1761 = vmatprep.subr.bf16.mxu0 0
      %1762 = vmatpush1.bf16.msra.mxu0 %v1701
      %1763 = vmatprep.subr.bf16.mxu0 0
      %1764 = vmatpush1.bf16.msra.mxu0 %v1700
      %1765 = vmatprep.subr.bf16.mxu0 0
      %1766 = vmatpush1.bf16.msra.mxu0 %v1699
      %1767 = vmatprep.subr.bf16.mxu0 0
      %1768 = vmatpush1.bf16.msra.mxu0 %v1698
      %1769 = vmatprep.subr.bf16.mxu0 0
      %1770 = vmatpush1.bf16.msra.mxu0 %v1697
      %1771 = vmatprep.subr.bf16.mxu0 0
      %1772 = vmatpush1.bf16.msra.mxu0 %v1696
      %1773 = vmatprep.subr.bf16.mxu0 0
      %1774 = vmatpush1.bf16.msra.mxu0 %v1695
      %1775 = vmatprep.subr.bf16.mxu0 0
      %1776 = vmatpush2.bf16.msra.mxu0 %v1710
      %1777 = vmatprep.subr.bf16.mxu0 0
      %1778 = vmatpush2.bf16.msra.mxu0 %v1709
      %1779 = vmatprep.subr.bf16.mxu0 0
      %1780 = vmatpush2.bf16.msra.mxu0 %v1708
      %1781 = vmatprep.subr.bf16.mxu0 0
      %1782 = vmatpush2.bf16.msra.mxu0 %v1707
      %1783 = vmatprep.subr.bf16.mxu0 0
      %1784 = vmatpush2.bf16.msra.mxu0 %v1706
      %1785 = vmatprep.subr.bf16.mxu0 0
      %1786 = vmatpush2.bf16.msra.mxu0 %v1705
      %1787 = vmatprep.subr.bf16.mxu0 0
      %1788 = vmatpush2.bf16.msra.mxu0 %v1704
      %1789 = vmatprep.subr.bf16.mxu0 0
      %1790 = vmatpush2.bf16.msra.mxu0 %v1703
      %1791 = vmatprep.mubr.bf16.mxu0 %v1493
      %1792 = vmatmul.mubr.bf16.gmra.mxu0 %v1492
      %v1793 = vpop.f32.mrf.mxu0
      %v1794 = vadd.f32 %v1565, %v1793
      %v1795 = vpop.f32.mrf.mxu0
      %v1796 = vpop.f32.mrf.mxu0
      %v1797 = vadd.f32 %v1565, %v1796
      %v1798 = vpop.f32.mrf.mxu0
      %1799 = vdwg.mxu0
      %1800 = vmatprep.subr.bf16.mxu0 0
      %1801 = vmatpush1.bf16.msra.mxu0 %v1718
      %1802 = vmatprep.subr.bf16.mxu0 0
      %1803 = vmatpush1.bf16.msra.mxu0 %v1717
      %1804 = vmatprep.subr.bf16.mxu0 0
      %1805 = vmatpush1.bf16.msra.mxu0 %v1716
      %1806 = vmatprep.subr.bf16.mxu0 0
      %1807 = vmatpush1.bf16.msra.mxu0 %v1715
      %1808 = vmatprep.subr.bf16.mxu0 0
      %1809 = vmatpush1.bf16.msra.mxu0 %v1714
      %1810 = vmatprep.subr.bf16.mxu0 0
      %1811 = vmatpush1.bf16.msra.mxu0 %v1713
      %1812 = vmatprep.subr.bf16.mxu0 0
      %1813 = vmatpush1.bf16.msra.mxu0 %v1712
      %1814 = vmatprep.subr.bf16.mxu0 0
      %1815 = vmatpush1.bf16.msra.mxu0 %v1711
      %1816 = vmatprep.subr.bf16.mxu0 0
      %1817 = vmatpush2.bf16.msra.mxu0 %v1726
      %1818 = vmatprep.subr.bf16.mxu0 0
      %1819 = vmatpush2.bf16.msra.mxu0 %v1725
      %1820 = vmatprep.subr.bf16.mxu0 0
      %1821 = vmatpush2.bf16.msra.mxu0 %v1724
      %1822 = vmatprep.subr.bf16.mxu0 0
      %1823 = vmatpush2.bf16.msra.mxu0 %v1723
      %1824 = vmatprep.subr.bf16.mxu0 0
      %1825 = vmatpush2.bf16.msra.mxu0 %v1722
      %1826 = vmatprep.subr.bf16.mxu0 0
      %1827 = vmatpush2.bf16.msra.mxu0 %v1721
      %1828 = vmatprep.subr.bf16.mxu0 0
      %1829 = vmatpush2.bf16.msra.mxu0 %v1720
      %1830 = vmatprep.subr.bf16.mxu0 0
      %1831 = vmatpush2.bf16.msra.mxu0 %v1719
      %1832 = vmatprep.mubr.bf16.mxu0 %v1495
      %1833 = vmatmul.mubr.bf16.gmra.mxu0 %v1494
      %v1834 = vpop.f32.mrf.mxu0
      %v1835 = vadd.f32 %v1794, %v1834
      %v1836 = vpop.f32.mrf.mxu0
      %v1837 = vpop.f32.mrf.mxu0
      %v1838 = vadd.f32 %v1797, %v1837
      %v1839 = vpop.f32.mrf.mxu0
      %1840 = vdwg.mxu0
      %v1841 = vld [vmem:[%s6] ss:$4 sm:$0xf]
      %1843 = vset.pattern.permute.xlu0 0
      %1844 = vperm.xlu0 %1843, %v1835
      %v1845 = vpop.permute.xlu0 %1844
      %1848 = vset.pattern.permute.xlu0 0
      %1849 = vperm.xlu0 %1848, %v1838
      %v1850 = vpop.permute.xlu0 %1849
      %v1853 = vlaneseq
      %v1854 = vshrl.u32 %v1853, 7
      %v1855 = vsub.s32 0, %v1854
      %v1856 = vrot.slane %v1841, %v1855
      %v1857 = vlaneseq
      %v1858 = vshrl.u32 %v1857, 7
      %v1859 = vsub.s32 1, %v1858
      %v1860 = vrot.slane %v1841, %v1859
      %v1861 = vlaneseq
      %v1862 = vshrl.u32 %v1861, 7
      %v1863 = vsub.s32 2, %v1862
      %v1864 = vrot.slane %v1841, %v1863
      %v1865 = vlaneseq
      %v1866 = vshrl.u32 %v1865, 7
      %v1867 = vsub.s32 3, %v1866
      %v1868 = vrot.slane %v1841, %v1867
      %v1873 = vmul.f32 %v1845, %v1856
      %v1874 = vmul.f32 %v1845, %v1860
      %v1875 = vmul.f32 %v1845, %v1864
      %v1876 = vmul.f32 %v1845, %v1868
      %v1877 = vmul.f32 %v1850, %v1856
      %v1878 = vmul.f32 %v1850, %v1860
      %v1879 = vmul.f32 %v1850, %v1864
      %v1880 = vmul.f32 %v1850, %v1868
      %v1881 = vlaneseq
      %v1882 = vshrl.u32 %v1881, 7
      %v1883 = vsub.s32 1, %v1882
      %v1884 = vrot.slane %v436, %v1883
      %v1885 = vlaneseq
      %v1886 = vshrl.u32 %v1885, 7
      %v1887 = vsub.s32 3, %v1886
      %v1888 = vrot.slane %v436, %v1887
      %v1889 = vlaneseq
      %v1890 = vshrl.u32 %v1889, 7
      %v1891 = vsub.s32 5, %v1890
      %v1892 = vrot.slane %v436, %v1891
      %v1893 = vlaneseq
      %v1894 = vshrl.u32 %v1893, 7
      %v1895 = vsub.s32 7, %v1894
      %v1896 = vrot.slane %v436, %v1895
      %v1901 = vlaneseq
      %v1902 = vshrl.u32 %v1901, 7
      %v1903 = vsub.s32 1, %v1902
      %v1904 = vrot.slane %v1884, %v1903
      %v1905 = vlaneseq
      %v1906 = vshrl.u32 %v1905, 7
      %v1907 = vsub.s32 1, %v1906
      %v1908 = vrot.slane %v1888, %v1907
      %v1909 = vlaneseq
      %v1910 = vshrl.u32 %v1909, 7
      %v1911 = vsub.s32 1, %v1910
      %v1912 = vrot.slane %v1892, %v1911
      %v1913 = vlaneseq
      %v1914 = vshrl.u32 %v1913, 7
      %v1915 = vsub.s32 1, %v1914
      %v1916 = vrot.slane %v1896, %v1915
      %v1917 = vadd.f32 %v1904, %v1873
      %v1918 = vadd.f32 %v1908, %v1874
      %v1919 = vadd.f32 %v1912, %v1875
      %v1920 = vadd.f32 %v1916, %v1876
      %v1921 = vadd.f32 %v1904, %v1877
      %v1922 = vadd.f32 %v1908, %v1878
      %v1923 = vadd.f32 %v1912, %v1879
      %v1924 = vadd.f32 %v1916, %v1880
      %s1925 = scalar_lea.vmem %s6, 1
      %v1926 = vld [vmem:[%s1925] ss:$4 sm:$0xf]
      %1927 = vset.pattern.permute.xlu0 1
      %1928 = vperm.xlu0 %1927, %v1835
      %v1929 = vpop.permute.xlu0 %1928
      %1931 = vset.pattern.permute.xlu0 1
      %1932 = vperm.xlu0 %1931, %v1838
      %v1933 = vpop.permute.xlu0 %1932
      %v1936 = vlaneseq
      %v1937 = vshrl.u32 %v1936, 7
      %v1938 = vsub.s32 0, %v1937
      %v1939 = vrot.slane %v1926, %v1938
      %v1940 = vlaneseq
      %v1941 = vshrl.u32 %v1940, 7
      %v1942 = vsub.s32 1, %v1941
      %v1943 = vrot.slane %v1926, %v1942
      %v1944 = vlaneseq
      %v1945 = vshrl.u32 %v1944, 7
      %v1946 = vsub.s32 2, %v1945
      %v1947 = vrot.slane %v1926, %v1946
      %v1948 = vlaneseq
      %v1949 = vshrl.u32 %v1948, 7
      %v1950 = vsub.s32 3, %v1949
      %v1951 = vrot.slane %v1926, %v1950
      %v1956 = vmul.f32 %v1929, %v1939
      %v1957 = vmul.f32 %v1929, %v1943
      %v1958 = vmul.f32 %v1929, %v1947
      %v1959 = vmul.f32 %v1929, %v1951
      %v1960 = vmul.f32 %v1933, %v1939
      %v1961 = vmul.f32 %v1933, %v1943
      %v1962 = vmul.f32 %v1933, %v1947
      %v1963 = vmul.f32 %v1933, %v1951
      %v1964 = vadd.f32 %v1917, %v1956
      %v1965 = vadd.f32 %v1918, %v1957
      %v1966 = vadd.f32 %v1919, %v1958
      %v1967 = vadd.f32 %v1920, %v1959
      %v1968 = vadd.f32 %v1921, %v1960
      %v1969 = vadd.f32 %v1922, %v1961
      %v1970 = vadd.f32 %v1923, %v1962
      %v1971 = vadd.f32 %v1924, %v1963
      %s1972 = scalar_lea.vmem %s6, 2
      %v1973 = vld [vmem:[%s1972] ss:$4 sm:$0xf]
      %1974 = vset.pattern.permute.xlu0 2
      %1975 = vperm.xlu0 %1974, %v1835
      %v1976 = vpop.permute.xlu0 %1975
      %1978 = vset.pattern.permute.xlu0 2
      %1979 = vperm.xlu0 %1978, %v1838
      %v1980 = vpop.permute.xlu0 %1979
      %v1983 = vlaneseq
      %v1984 = vshrl.u32 %v1983, 7
      %v1985 = vsub.s32 0, %v1984
      %v1986 = vrot.slane %v1973, %v1985
      %v1987 = vlaneseq
      %v1988 = vshrl.u32 %v1987, 7
      %v1989 = vsub.s32 1, %v1988
      %v1990 = vrot.slane %v1973, %v1989
      %v1991 = vlaneseq
      %v1992 = vshrl.u32 %v1991, 7
      %v1993 = vsub.s32 2, %v1992
      %v1994 = vrot.slane %v1973, %v1993
      %v1995 = vlaneseq
      %v1996 = vshrl.u32 %v1995, 7
      %v1997 = vsub.s32 3, %v1996
      %v1998 = vrot.slane %v1973, %v1997
      %v2003 = vmul.f32 %v1976, %v1986
      %v2004 = vmul.f32 %v1976, %v1990
      %v2005 = vmul.f32 %v1976, %v1994
      %v2006 = vmul.f32 %v1976, %v1998
      %v2007 = vmul.f32 %v1980, %v1986
      %v2008 = vmul.f32 %v1980, %v1990
      %v2009 = vmul.f32 %v1980, %v1994
      %v2010 = vmul.f32 %v1980, %v1998
      %v2011 = vadd.f32 %v1964, %v2003
      %v2012 = vadd.f32 %v1965, %v2004
      %v2013 = vadd.f32 %v1966, %v2005
      %v2014 = vadd.f32 %v1967, %v2006
      %v2015 = vadd.f32 %v1968, %v2007
      %v2016 = vadd.f32 %v1969, %v2008
      %v2017 = vadd.f32 %v1970, %v2009
      %v2018 = vadd.f32 %v1971, %v2010
      %v2019 = vmax.f32 %v2011, 0.0
      %v2020 = vmax.f32 %v2012, 0.0
      %v2021 = vmax.f32 %v2013, 0.0
      %v2022 = vmax.f32 %v2014, 0.0
      %v2023 = vmax.f32 %v2015, 0.0
      %v2024 = vmax.f32 %v2016, 0.0
      %v2025 = vmax.f32 %v2017, 0.0
      %v2026 = vmax.f32 %v2018, 0.0
      %v2027 = vpack.c.bf16 %v2023, %v2019
      %v2028 = vpack.c.bf16 %v2024, %v2020
      %v2029 = vpack.c.bf16 %v2025, %v2021
      %v2030 = vpack.c.bf16 %v2026, %v2022
      %v2031 = vld [vmem:[%s7] sm:$0xff]
      %v2032 = vld [vmem:[%s7 + $0x8] sm:$0xff]
      %v2033 = vld [vmem:[%s7 + $0x10] sm:$0xff]
      %v2034 = vld [vmem:[%s7 + $0x18] sm:$0xff]
      %v2035 = vld [vmem:[%s7 + $0x20] sm:$0xff]
      %v2036 = vld [vmem:[%s7 + $0x28] sm:$0xff]
      %v2037 = vld [vmem:[%s7 + $0x30] sm:$0xff]
      %v2038 = vld [vmem:[%s7 + $0x38] sm:$0xff]
      %v2039 = vld [vmem:[%s7 + $0x40] sm:$0xff]
      %v2040 = vld [vmem:[%s7 + $0x48] sm:$0xff]
      %v2041 = vld [vmem:[%s7 + $0x50] sm:$0xff]
      %v2042 = vld [vmem:[%s7 + $0x58] sm:$0xff]
      %v2043 = vld [vmem:[%s7 + $0x60] sm:$0xff]
      %v2044 = vld [vmem:[%s7 + $0x68] sm:$0xff]
      %v2045 = vld [vmem:[%s7 + $0x70] sm:$0xff]
      %v2046 = vld [vmem:[%s7 + $0x78] sm:$0xff]
      %v2047 = vld [vmem:[%s7 + $0x80] sm:$0xff]
      %v2048 = vld [vmem:[%s7 + $0x88] sm:$0xff]
      %v2049 = vld [vmem:[%s7 + $0x90] sm:$0xff]
      %v2050 = vld [vmem:[%s7 + $0x98] sm:$0xff]
      %v2051 = vld [vmem:[%s7 + $0xa0] sm:$0xff]
      %v2052 = vld [vmem:[%s7 + $0xa8] sm:$0xff]
      %v2053 = vld [vmem:[%s7 + $0xb0] sm:$0xff]
      %v2054 = vld [vmem:[%s7 + $0xb8] sm:$0xff]
      %v2055 = vld [vmem:[%s7 + $0xc0] sm:$0xff]
      %v2056 = vld [vmem:[%s7 + $0xc8] sm:$0xff]
      %v2057 = vld [vmem:[%s7 + $0xd0] sm:$0xff]
      %v2058 = vld [vmem:[%s7 + $0xd8] sm:$0xff]
      %v2059 = vld [vmem:[%s7 + $0xe0] sm:$0xff]
      %v2060 = vld [vmem:[%s7 + $0xe8] sm:$0xff]
      %v2061 = vld [vmem:[%s7 + $0xf0] sm:$0xff]
      %v2062 = vld [vmem:[%s7 + $0xf8] sm:$0xff]
      %v2063 = vld [vmem:[%s7 + $0x100] sm:$0xff]
      %v2064 = vld [vmem:[%s7 + $0x108] sm:$0xff]
      %v2065 = vld [vmem:[%s7 + $0x110] sm:$0xff]
      %v2066 = vld [vmem:[%s7 + $0x118] sm:$0xff]
      %v2067 = vld [vmem:[%s7 + $0x120] sm:$0xff]
      %v2068 = vld [vmem:[%s7 + $0x128] sm:$0xff]
      %v2069 = vld [vmem:[%s7 + $0x130] sm:$0xff]
      %v2070 = vld [vmem:[%s7 + $0x138] sm:$0xff]
      %v2071 = vld [vmem:[%s7 + $0x140] sm:$0xff]
      %v2072 = vld [vmem:[%s7 + $0x148] sm:$0xff]
      %v2073 = vld [vmem:[%s7 + $0x150] sm:$0xff]
      %v2074 = vld [vmem:[%s7 + $0x158] sm:$0xff]
      %v2075 = vld [vmem:[%s7 + $0x160] sm:$0xff]
      %v2076 = vld [vmem:[%s7 + $0x168] sm:$0xff]
      %v2077 = vld [vmem:[%s7 + $0x170] sm:$0xff]
      %v2078 = vld [vmem:[%s7 + $0x178] sm:$0xff]
      %v2079 = vld [vmem:[%s7 + $0x180] sm:$0xff]
      %v2080 = vld [vmem:[%s7 + $0x188] sm:$0xff]
      %v2081 = vld [vmem:[%s7 + $0x190] sm:$0xff]
      %v2082 = vld [vmem:[%s7 + $0x198] sm:$0xff]
      %v2083 = vld [vmem:[%s7 + $0x1a0] sm:$0xff]
      %v2084 = vld [vmem:[%s7 + $0x1a8] sm:$0xff]
      %v2085 = vld [vmem:[%s7 + $0x1b0] sm:$0xff]
      %v2086 = vld [vmem:[%s7 + $0x1b8] sm:$0xff]
      %v2087 = vld [vmem:[%s7 + $0x1c0] sm:$0xff]
      %v2088 = vld [vmem:[%s7 + $0x1c8] sm:$0xff]
      %v2089 = vld [vmem:[%s7 + $0x1d0] sm:$0xff]
      %v2090 = vld [vmem:[%s7 + $0x1d8] sm:$0xff]
      %v2091 = vld [vmem:[%s7 + $0x1e0] sm:$0xff]
      %v2092 = vld [vmem:[%s7 + $0x1e8] sm:$0xff]
      %v2093 = vld [vmem:[%s7 + $0x1f0] sm:$0xff]
      %v2094 = vld [vmem:[%s7 + $0x1f8] sm:$0xff]
      %v2095 = vld [vmem:[%s7 + $0x200] sm:$0xff]
      %v2096 = vld [vmem:[%s7 + $0x208] sm:$0xff]
      %v2097 = vld [vmem:[%s7 + $0x210] sm:$0xff]
      %v2098 = vld [vmem:[%s7 + $0x218] sm:$0xff]
      %v2099 = vld [vmem:[%s7 + $0x220] sm:$0xff]
      %v2100 = vld [vmem:[%s7 + $0x228] sm:$0xff]
      %v2101 = vld [vmem:[%s7 + $0x230] sm:$0xff]
      %v2102 = vld [vmem:[%s7 + $0x238] sm:$0xff]
      %v2103 = vld [vmem:[%s7 + $0x240] sm:$0xff]
      %v2104 = vld [vmem:[%s7 + $0x248] sm:$0xff]
      %v2105 = vld [vmem:[%s7 + $0x250] sm:$0xff]
      %v2106 = vld [vmem:[%s7 + $0x258] sm:$0xff]
      %v2107 = vld [vmem:[%s7 + $0x260] sm:$0xff]
      %v2108 = vld [vmem:[%s7 + $0x268] sm:$0xff]
      %v2109 = vld [vmem:[%s7 + $0x270] sm:$0xff]
      %v2110 = vld [vmem:[%s7 + $0x278] sm:$0xff]
      %v2111 = vld [vmem:[%s7 + $0x280] sm:$0xff]
      %v2112 = vld [vmem:[%s7 + $0x288] sm:$0xff]
      %v2113 = vld [vmem:[%s7 + $0x290] sm:$0xff]
      %v2114 = vld [vmem:[%s7 + $0x298] sm:$0xff]
      %v2115 = vld [vmem:[%s7 + $0x2a0] sm:$0xff]
      %v2116 = vld [vmem:[%s7 + $0x2a8] sm:$0xff]
      %v2117 = vld [vmem:[%s7 + $0x2b0] sm:$0xff]
      %v2118 = vld [vmem:[%s7 + $0x2b8] sm:$0xff]
      %v2119 = vld [vmem:[%s7 + $0x2c0] sm:$0xff]
      %v2120 = vld [vmem:[%s7 + $0x2c8] sm:$0xff]
      %v2121 = vld [vmem:[%s7 + $0x2d0] sm:$0xff]
      %v2122 = vld [vmem:[%s7 + $0x2d8] sm:$0xff]
      %v2123 = vld [vmem:[%s7 + $0x2e0] sm:$0xff]
      %v2124 = vld [vmem:[%s7 + $0x2e8] sm:$0xff]
      %v2125 = vld [vmem:[%s7 + $0x2f0] sm:$0xff]
      %v2126 = vld [vmem:[%s7 + $0x2f8] sm:$0xff]
      %v2127 = vld [vmem:[%s7 + $0x300] sm:$0xff]
      %v2128 = vld [vmem:[%s7 + $0x308] sm:$0xff]
      %v2129 = vld [vmem:[%s7 + $0x310] sm:$0xff]
      %v2130 = vld [vmem:[%s7 + $0x318] sm:$0xff]
      %v2131 = vld [vmem:[%s7 + $0x320] sm:$0xff]
      %v2132 = vld [vmem:[%s7 + $0x328] sm:$0xff]
      %v2133 = vld [vmem:[%s7 + $0x330] sm:$0xff]
      %v2134 = vld [vmem:[%s7 + $0x338] sm:$0xff]
      %v2135 = vld [vmem:[%s7 + $0x340] sm:$0xff]
      %v2136 = vld [vmem:[%s7 + $0x348] sm:$0xff]
      %v2137 = vld [vmem:[%s7 + $0x350] sm:$0xff]
      %v2138 = vld [vmem:[%s7 + $0x358] sm:$0xff]
      %v2139 = vld [vmem:[%s7 + $0x360] sm:$0xff]
      %v2140 = vld [vmem:[%s7 + $0x368] sm:$0xff]
      %v2141 = vld [vmem:[%s7 + $0x370] sm:$0xff]
      %v2142 = vld [vmem:[%s7 + $0x378] sm:$0xff]
      %v2143 = vld [vmem:[%s7 + $0x380] sm:$0xff]
      %v2144 = vld [vmem:[%s7 + $0x388] sm:$0xff]
      %v2145 = vld [vmem:[%s7 + $0x390] sm:$0xff]
      %v2146 = vld [vmem:[%s7 + $0x398] sm:$0xff]
      %v2147 = vld [vmem:[%s7 + $0x3a0] sm:$0xff]
      %v2148 = vld [vmem:[%s7 + $0x3a8] sm:$0xff]
      %v2149 = vld [vmem:[%s7 + $0x3b0] sm:$0xff]
      %v2150 = vld [vmem:[%s7 + $0x3b8] sm:$0xff]
      %v2151 = vld [vmem:[%s7 + $0x3c0] sm:$0xff]
      %v2152 = vld [vmem:[%s7 + $0x3c8] sm:$0xff]
      %v2153 = vld [vmem:[%s7 + $0x3d0] sm:$0xff]
      %v2154 = vld [vmem:[%s7 + $0x3d8] sm:$0xff]
      %v2155 = vld [vmem:[%s7 + $0x3e0] sm:$0xff]
      %v2156 = vld [vmem:[%s7 + $0x3e8] sm:$0xff]
      %v2157 = vld [vmem:[%s7 + $0x3f0] sm:$0xff]
      %v2158 = vld [vmem:[%s7 + $0x3f8] sm:$0xff]
      %v2159 = vld [vmem:[%s8] sm:$0xf]
      %v2161 = vlaneseq
      %v2162 = vshrl.u32 %v2161, 7
      %v2163 = vsub.s32 0, %v2162
      %v2164 = vrot.slane %v2159, %v2163
      %v2165 = vlaneseq
      %v2166 = vshrl.u32 %v2165, 7
      %v2167 = vsub.s32 1, %v2166
      %v2168 = vrot.slane %v2159, %v2167
      %v2169 = vlaneseq
      %v2170 = vshrl.u32 %v2169, 7
      %v2171 = vsub.s32 2, %v2170
      %v2172 = vrot.slane %v2159, %v2171
      %v2173 = vlaneseq
      %v2174 = vshrl.u32 %v2173, 7
      %v2175 = vsub.s32 3, %v2174
      %v2176 = vrot.slane %v2159, %v2175
      %v2309 = vunpack.c.l.b16 %v2031
      %v2310 = vunpack.c.h.b16 %v2031
      %v2311 = vunpack.c.l.b16 %v2032
      %v2312 = vunpack.c.h.b16 %v2032
      %v2313 = vunpack.c.l.b16 %v2033
      %v2314 = vunpack.c.h.b16 %v2033
      %v2315 = vunpack.c.l.b16 %v2034
      %v2316 = vunpack.c.h.b16 %v2034
      %v2317 = vunpack.c.l.b16 %v2035
      %v2318 = vunpack.c.h.b16 %v2035
      %v2319 = vunpack.c.l.b16 %v2036
      %v2320 = vunpack.c.h.b16 %v2036
      %v2321 = vunpack.c.l.b16 %v2037
      %v2322 = vunpack.c.h.b16 %v2037
      %v2323 = vunpack.c.l.b16 %v2038
      %v2324 = vunpack.c.h.b16 %v2038
      %v2325 = vunpack.c.l.b16 %v2039
      %v2326 = vunpack.c.h.b16 %v2039
      %v2327 = vunpack.c.l.b16 %v2040
      %v2328 = vunpack.c.h.b16 %v2040
      %v2329 = vunpack.c.l.b16 %v2041
      %v2330 = vunpack.c.h.b16 %v2041
      %v2331 = vunpack.c.l.b16 %v2042
      %v2332 = vunpack.c.h.b16 %v2042
      %v2333 = vunpack.c.l.b16 %v2043
      %v2334 = vunpack.c.h.b16 %v2043
      %v2335 = vunpack.c.l.b16 %v2044
      %v2336 = vunpack.c.h.b16 %v2044
      %v2337 = vunpack.c.l.b16 %v2045
      %v2338 = vunpack.c.h.b16 %v2045
      %v2339 = vunpack.c.l.b16 %v2046
      %v2340 = vunpack.c.h.b16 %v2046
      %v2341 = vunpack.c.l.b16 %v2047
      %v2342 = vunpack.c.h.b16 %v2047
      %v2343 = vunpack.c.l.b16 %v2048
      %v2344 = vunpack.c.h.b16 %v2048
      %v2345 = vunpack.c.l.b16 %v2049
      %v2346 = vunpack.c.h.b16 %v2049
      %v2347 = vunpack.c.l.b16 %v2050
      %v2348 = vunpack.c.h.b16 %v2050
      %v2349 = vunpack.c.l.b16 %v2051
      %v2350 = vunpack.c.h.b16 %v2051
      %v2351 = vunpack.c.l.b16 %v2052
      %v2352 = vunpack.c.h.b16 %v2052
      %v2353 = vunpack.c.l.b16 %v2053
      %v2354 = vunpack.c.h.b16 %v2053
      %v2355 = vunpack.c.l.b16 %v2054
      %v2356 = vunpack.c.h.b16 %v2054
      %v2357 = vunpack.c.l.b16 %v2055
      %v2358 = vunpack.c.h.b16 %v2055
      %v2359 = vunpack.c.l.b16 %v2056
      %v2360 = vunpack.c.h.b16 %v2056
      %v2361 = vunpack.c.l.b16 %v2057
      %v2362 = vunpack.c.h.b16 %v2057
      %v2363 = vunpack.c.l.b16 %v2058
      %v2364 = vunpack.c.h.b16 %v2058
      %v2365 = vunpack.c.l.b16 %v2059
      %v2366 = vunpack.c.h.b16 %v2059
      %v2367 = vunpack.c.l.b16 %v2060
      %v2368 = vunpack.c.h.b16 %v2060
      %v2369 = vunpack.c.l.b16 %v2061
      %v2370 = vunpack.c.h.b16 %v2061
      %v2371 = vunpack.c.l.b16 %v2062
      %v2372 = vunpack.c.h.b16 %v2062
      %v2373 = vunpack.c.l.b16 %v2063
      %v2374 = vunpack.c.h.b16 %v2063
      %v2375 = vunpack.c.l.b16 %v2064
      %v2376 = vunpack.c.h.b16 %v2064
      %v2377 = vunpack.c.l.b16 %v2065
      %v2378 = vunpack.c.h.b16 %v2065
      %v2379 = vunpack.c.l.b16 %v2066
      %v2380 = vunpack.c.h.b16 %v2066
      %v2381 = vunpack.c.l.b16 %v2067
      %v2382 = vunpack.c.h.b16 %v2067
      %v2383 = vunpack.c.l.b16 %v2068
      %v2384 = vunpack.c.h.b16 %v2068
      %v2385 = vunpack.c.l.b16 %v2069
      %v2386 = vunpack.c.h.b16 %v2069
      %v2387 = vunpack.c.l.b16 %v2070
      %v2388 = vunpack.c.h.b16 %v2070
      %v2389 = vunpack.c.l.b16 %v2071
      %v2390 = vunpack.c.h.b16 %v2071
      %v2391 = vunpack.c.l.b16 %v2072
      %v2392 = vunpack.c.h.b16 %v2072
      %v2393 = vunpack.c.l.b16 %v2073
      %v2394 = vunpack.c.h.b16 %v2073
      %v2395 = vunpack.c.l.b16 %v2074
      %v2396 = vunpack.c.h.b16 %v2074
      %v2397 = vunpack.c.l.b16 %v2075
      %v2398 = vunpack.c.h.b16 %v2075
      %v2399 = vunpack.c.l.b16 %v2076
      %v2400 = vunpack.c.h.b16 %v2076
      %v2401 = vunpack.c.l.b16 %v2077
      %v2402 = vunpack.c.h.b16 %v2077
      %v2403 = vunpack.c.l.b16 %v2078
      %v2404 = vunpack.c.h.b16 %v2078
      %v2405 = vunpack.c.l.b16 %v2079
      %v2406 = vunpack.c.h.b16 %v2079
      %v2407 = vunpack.c.l.b16 %v2080
      %v2408 = vunpack.c.h.b16 %v2080
      %v2409 = vunpack.c.l.b16 %v2081
      %v2410 = vunpack.c.h.b16 %v2081
      %v2411 = vunpack.c.l.b16 %v2082
      %v2412 = vunpack.c.h.b16 %v2082
      %v2413 = vunpack.c.l.b16 %v2083
      %v2414 = vunpack.c.h.b16 %v2083
      %v2415 = vunpack.c.l.b16 %v2084
      %v2416 = vunpack.c.h.b16 %v2084
      %v2417 = vunpack.c.l.b16 %v2085
      %v2418 = vunpack.c.h.b16 %v2085
      %v2419 = vunpack.c.l.b16 %v2086
      %v2420 = vunpack.c.h.b16 %v2086
      %v2421 = vunpack.c.l.b16 %v2087
      %v2422 = vunpack.c.h.b16 %v2087
      %v2423 = vunpack.c.l.b16 %v2088
      %v2424 = vunpack.c.h.b16 %v2088
      %v2425 = vunpack.c.l.b16 %v2089
      %v2426 = vunpack.c.h.b16 %v2089
      %v2427 = vunpack.c.l.b16 %v2090
      %v2428 = vunpack.c.h.b16 %v2090
      %v2429 = vunpack.c.l.b16 %v2091
      %v2430 = vunpack.c.h.b16 %v2091
      %v2431 = vunpack.c.l.b16 %v2092
      %v2432 = vunpack.c.h.b16 %v2092
      %v2433 = vunpack.c.l.b16 %v2093
      %v2434 = vunpack.c.h.b16 %v2093
      %v2435 = vunpack.c.l.b16 %v2094
      %v2436 = vunpack.c.h.b16 %v2094
      %v2437 = vunpack.c.l.b16 %v2095
      %v2438 = vunpack.c.h.b16 %v2095
      %v2439 = vunpack.c.l.b16 %v2096
      %v2440 = vunpack.c.h.b16 %v2096
      %v2441 = vunpack.c.l.b16 %v2097
      %v2442 = vunpack.c.h.b16 %v2097
      %v2443 = vunpack.c.l.b16 %v2098
      %v2444 = vunpack.c.h.b16 %v2098
      %v2445 = vunpack.c.l.b16 %v2099
      %v2446 = vunpack.c.h.b16 %v2099
      %v2447 = vunpack.c.l.b16 %v2100
      %v2448 = vunpack.c.h.b16 %v2100
      %v2449 = vunpack.c.l.b16 %v2101
      %v2450 = vunpack.c.h.b16 %v2101
      %v2451 = vunpack.c.l.b16 %v2102
      %v2452 = vunpack.c.h.b16 %v2102
      %v2453 = vunpack.c.l.b16 %v2103
      %v2454 = vunpack.c.h.b16 %v2103
      %v2455 = vunpack.c.l.b16 %v2104
      %v2456 = vunpack.c.h.b16 %v2104
      %v2457 = vunpack.c.l.b16 %v2105
      %v2458 = vunpack.c.h.b16 %v2105
      %v2459 = vunpack.c.l.b16 %v2106
      %v2460 = vunpack.c.h.b16 %v2106
      %v2461 = vunpack.c.l.b16 %v2107
      %v2462 = vunpack.c.h.b16 %v2107
      %v2463 = vunpack.c.l.b16 %v2108
      %v2464 = vunpack.c.h.b16 %v2108
      %v2465 = vunpack.c.l.b16 %v2109
      %v2466 = vunpack.c.h.b16 %v2109
      %v2467 = vunpack.c.l.b16 %v2110
      %v2468 = vunpack.c.h.b16 %v2110
      %v2469 = vunpack.c.l.b16 %v2111
      %v2470 = vunpack.c.h.b16 %v2111
      %v2471 = vunpack.c.l.b16 %v2112
      %v2472 = vunpack.c.h.b16 %v2112
      %v2473 = vunpack.c.l.b16 %v2113
      %v2474 = vunpack.c.h.b16 %v2113
      %v2475 = vunpack.c.l.b16 %v2114
      %v2476 = vunpack.c.h.b16 %v2114
      %v2477 = vunpack.c.l.b16 %v2115
      %v2478 = vunpack.c.h.b16 %v2115
      %v2479 = vunpack.c.l.b16 %v2116
      %v2480 = vunpack.c.h.b16 %v2116
      %v2481 = vunpack.c.l.b16 %v2117
      %v2482 = vunpack.c.h.b16 %v2117
      %v2483 = vunpack.c.l.b16 %v2118
      %v2484 = vunpack.c.h.b16 %v2118
      %v2485 = vunpack.c.l.b16 %v2119
      %v2486 = vunpack.c.h.b16 %v2119
      %v2487 = vunpack.c.l.b16 %v2120
      %v2488 = vunpack.c.h.b16 %v2120
      %v2489 = vunpack.c.l.b16 %v2121
      %v2490 = vunpack.c.h.b16 %v2121
      %v2491 = vunpack.c.l.b16 %v2122
      %v2492 = vunpack.c.h.b16 %v2122
      %v2493 = vunpack.c.l.b16 %v2123
      %v2494 = vunpack.c.h.b16 %v2123
      %v2495 = vunpack.c.l.b16 %v2124
      %v2496 = vunpack.c.h.b16 %v2124
      %v2497 = vunpack.c.l.b16 %v2125
      %v2498 = vunpack.c.h.b16 %v2125
      %v2499 = vunpack.c.l.b16 %v2126
      %v2500 = vunpack.c.h.b16 %v2126
      %v2501 = vunpack.c.l.b16 %v2127
      %v2502 = vunpack.c.h.b16 %v2127
      %v2503 = vunpack.c.l.b16 %v2128
      %v2504 = vunpack.c.h.b16 %v2128
      %v2505 = vunpack.c.l.b16 %v2129
      %v2506 = vunpack.c.h.b16 %v2129
      %v2507 = vunpack.c.l.b16 %v2130
      %v2508 = vunpack.c.h.b16 %v2130
      %v2509 = vunpack.c.l.b16 %v2131
      %v2510 = vunpack.c.h.b16 %v2131
      %v2511 = vunpack.c.l.b16 %v2132
      %v2512 = vunpack.c.h.b16 %v2132
      %v2513 = vunpack.c.l.b16 %v2133
      %v2514 = vunpack.c.h.b16 %v2133
      %v2515 = vunpack.c.l.b16 %v2134
      %v2516 = vunpack.c.h.b16 %v2134
      %v2517 = vunpack.c.l.b16 %v2135
      %v2518 = vunpack.c.h.b16 %v2135
      %v2519 = vunpack.c.l.b16 %v2136
      %v2520 = vunpack.c.h.b16 %v2136
      %v2521 = vunpack.c.l.b16 %v2137
      %v2522 = vunpack.c.h.b16 %v2137
      %v2523 = vunpack.c.l.b16 %v2138
      %v2524 = vunpack.c.h.b16 %v2138
      %v2525 = vunpack.c.l.b16 %v2139
      %v2526 = vunpack.c.h.b16 %v2139
      %v2527 = vunpack.c.l.b16 %v2140
      %v2528 = vunpack.c.h.b16 %v2140
      %v2529 = vunpack.c.l.b16 %v2141
      %v2530 = vunpack.c.h.b16 %v2141
      %v2531 = vunpack.c.l.b16 %v2142
      %v2532 = vunpack.c.h.b16 %v2142
      %v2533 = vunpack.c.l.b16 %v2143
      %v2534 = vunpack.c.h.b16 %v2143
      %v2535 = vunpack.c.l.b16 %v2144
      %v2536 = vunpack.c.h.b16 %v2144
      %v2537 = vunpack.c.l.b16 %v2145
      %v2538 = vunpack.c.h.b16 %v2145
      %v2539 = vunpack.c.l.b16 %v2146
      %v2540 = vunpack.c.h.b16 %v2146
      %v2541 = vunpack.c.l.b16 %v2147
      %v2542 = vunpack.c.h.b16 %v2147
      %v2543 = vunpack.c.l.b16 %v2148
      %v2544 = vunpack.c.h.b16 %v2148
      %v2545 = vunpack.c.l.b16 %v2149
      %v2546 = vunpack.c.h.b16 %v2149
      %v2547 = vunpack.c.l.b16 %v2150
      %v2548 = vunpack.c.h.b16 %v2150
      %v2549 = vunpack.c.l.b16 %v2151
      %v2550 = vunpack.c.h.b16 %v2151
      %v2551 = vunpack.c.l.b16 %v2152
      %v2552 = vunpack.c.h.b16 %v2152
      %v2553 = vunpack.c.l.b16 %v2153
      %v2554 = vunpack.c.h.b16 %v2153
      %v2555 = vunpack.c.l.b16 %v2154
      %v2556 = vunpack.c.h.b16 %v2154
      %v2557 = vunpack.c.l.b16 %v2155
      %v2558 = vunpack.c.h.b16 %v2155
      %v2559 = vunpack.c.l.b16 %v2156
      %v2560 = vunpack.c.h.b16 %v2156
      %v2561 = vunpack.c.l.b16 %v2157
      %v2562 = vunpack.c.h.b16 %v2157
      %v2563 = vunpack.c.l.b16 %v2158
      %v2564 = vunpack.c.h.b16 %v2158
      %v2565 = vpack.c.b16 %v2313, %v2309
      %v2566 = vpack.c.b16 %v2314, %v2310
      %v2567 = vpack.c.b16 %v2315, %v2311
      %v2568 = vpack.c.b16 %v2316, %v2312
      %v2569 = vpack.c.b16 %v2321, %v2317
      %v2570 = vpack.c.b16 %v2322, %v2318
      %v2571 = vpack.c.b16 %v2323, %v2319
      %v2572 = vpack.c.b16 %v2324, %v2320
      %v2573 = vpack.c.b16 %v2329, %v2325
      %v2574 = vpack.c.b16 %v2330, %v2326
      %v2575 = vpack.c.b16 %v2331, %v2327
      %v2576 = vpack.c.b16 %v2332, %v2328
      %v2577 = vpack.c.b16 %v2337, %v2333
      %v2578 = vpack.c.b16 %v2338, %v2334
      %v2579 = vpack.c.b16 %v2339, %v2335
      %v2580 = vpack.c.b16 %v2340, %v2336
      %v2581 = vpack.c.b16 %v2345, %v2341
      %v2582 = vpack.c.b16 %v2346, %v2342
      %v2583 = vpack.c.b16 %v2347, %v2343
      %v2584 = vpack.c.b16 %v2348, %v2344
      %v2585 = vpack.c.b16 %v2353, %v2349
      %v2586 = vpack.c.b16 %v2354, %v2350
      %v2587 = vpack.c.b16 %v2355, %v2351
      %v2588 = vpack.c.b16 %v2356, %v2352
      %v2589 = vpack.c.b16 %v2361, %v2357
      %v2590 = vpack.c.b16 %v2362, %v2358
      %v2591 = vpack.c.b16 %v2363, %v2359
      %v2592 = vpack.c.b16 %v2364, %v2360
      %v2593 = vpack.c.b16 %v2369, %v2365
      %v2594 = vpack.c.b16 %v2370, %v2366
      %v2595 = vpack.c.b16 %v2371, %v2367
      %v2596 = vpack.c.b16 %v2372, %v2368
      %v2597 = vpack.c.b16 %v2377, %v2373
      %v2598 = vpack.c.b16 %v2378, %v2374
      %v2599 = vpack.c.b16 %v2379, %v2375
      %v2600 = vpack.c.b16 %v2380, %v2376
      %v2601 = vpack.c.b16 %v2385, %v2381
      %v2602 = vpack.c.b16 %v2386, %v2382
      %v2603 = vpack.c.b16 %v2387, %v2383
      %v2604 = vpack.c.b16 %v2388, %v2384
      %v2605 = vpack.c.b16 %v2393, %v2389
      %v2606 = vpack.c.b16 %v2394, %v2390
      %v2607 = vpack.c.b16 %v2395, %v2391
      %v2608 = vpack.c.b16 %v2396, %v2392
      %v2609 = vpack.c.b16 %v2401, %v2397
      %v2610 = vpack.c.b16 %v2402, %v2398
      %v2611 = vpack.c.b16 %v2403, %v2399
      %v2612 = vpack.c.b16 %v2404, %v2400
      %v2613 = vpack.c.b16 %v2409, %v2405
      %v2614 = vpack.c.b16 %v2410, %v2406
      %v2615 = vpack.c.b16 %v2411, %v2407
      %v2616 = vpack.c.b16 %v2412, %v2408
      %v2617 = vpack.c.b16 %v2417, %v2413
      %v2618 = vpack.c.b16 %v2418, %v2414
      %v2619 = vpack.c.b16 %v2419, %v2415
      %v2620 = vpack.c.b16 %v2420, %v2416
      %v2621 = vpack.c.b16 %v2425, %v2421
      %v2622 = vpack.c.b16 %v2426, %v2422
      %v2623 = vpack.c.b16 %v2427, %v2423
      %v2624 = vpack.c.b16 %v2428, %v2424
      %v2625 = vpack.c.b16 %v2433, %v2429
      %v2626 = vpack.c.b16 %v2434, %v2430
      %v2627 = vpack.c.b16 %v2435, %v2431
      %v2628 = vpack.c.b16 %v2436, %v2432
      %v2629 = vpack.c.b16 %v2441, %v2437
      %v2630 = vpack.c.b16 %v2442, %v2438
      %v2631 = vpack.c.b16 %v2443, %v2439
      %v2632 = vpack.c.b16 %v2444, %v2440
      %v2633 = vpack.c.b16 %v2449, %v2445
      %v2634 = vpack.c.b16 %v2450, %v2446
      %v2635 = vpack.c.b16 %v2451, %v2447
      %v2636 = vpack.c.b16 %v2452, %v2448
      %v2637 = vpack.c.b16 %v2457, %v2453
      %v2638 = vpack.c.b16 %v2458, %v2454
      %v2639 = vpack.c.b16 %v2459, %v2455
      %v2640 = vpack.c.b16 %v2460, %v2456
      %v2641 = vpack.c.b16 %v2465, %v2461
      %v2642 = vpack.c.b16 %v2466, %v2462
      %v2643 = vpack.c.b16 %v2467, %v2463
      %v2644 = vpack.c.b16 %v2468, %v2464
      %v2645 = vpack.c.b16 %v2473, %v2469
      %v2646 = vpack.c.b16 %v2474, %v2470
      %v2647 = vpack.c.b16 %v2475, %v2471
      %v2648 = vpack.c.b16 %v2476, %v2472
      %v2649 = vpack.c.b16 %v2481, %v2477
      %v2650 = vpack.c.b16 %v2482, %v2478
      %v2651 = vpack.c.b16 %v2483, %v2479
      %v2652 = vpack.c.b16 %v2484, %v2480
      %v2653 = vpack.c.b16 %v2489, %v2485
      %v2654 = vpack.c.b16 %v2490, %v2486
      %v2655 = vpack.c.b16 %v2491, %v2487
      %v2656 = vpack.c.b16 %v2492, %v2488
      %v2657 = vpack.c.b16 %v2497, %v2493
      %v2658 = vpack.c.b16 %v2498, %v2494
      %v2659 = vpack.c.b16 %v2499, %v2495
      %v2660 = vpack.c.b16 %v2500, %v2496
      %v2661 = vpack.c.b16 %v2505, %v2501
      %v2662 = vpack.c.b16 %v2506, %v2502
      %v2663 = vpack.c.b16 %v2507, %v2503
      %v2664 = vpack.c.b16 %v2508, %v2504
      %v2665 = vpack.c.b16 %v2513, %v2509
      %v2666 = vpack.c.b16 %v2514, %v2510
      %v2667 = vpack.c.b16 %v2515, %v2511
      %v2668 = vpack.c.b16 %v2516, %v2512
      %v2669 = vpack.c.b16 %v2521, %v2517
      %v2670 = vpack.c.b16 %v2522, %v2518
      %v2671 = vpack.c.b16 %v2523, %v2519
      %v2672 = vpack.c.b16 %v2524, %v2520
      %v2673 = vpack.c.b16 %v2529, %v2525
      %v2674 = vpack.c.b16 %v2530, %v2526
      %v2675 = vpack.c.b16 %v2531, %v2527
      %v2676 = vpack.c.b16 %v2532, %v2528
      %v2677 = vpack.c.b16 %v2537, %v2533
      %v2678 = vpack.c.b16 %v2538, %v2534
      %v2679 = vpack.c.b16 %v2539, %v2535
      %v2680 = vpack.c.b16 %v2540, %v2536
      %v2681 = vpack.c.b16 %v2545, %v2541
      %v2682 = vpack.c.b16 %v2546, %v2542
      %v2683 = vpack.c.b16 %v2547, %v2543
      %v2684 = vpack.c.b16 %v2548, %v2544
      %v2685 = vpack.c.b16 %v2553, %v2549
      %v2686 = vpack.c.b16 %v2554, %v2550
      %v2687 = vpack.c.b16 %v2555, %v2551
      %v2688 = vpack.c.b16 %v2556, %v2552
      %v2689 = vpack.c.b16 %v2561, %v2557
      %v2690 = vpack.c.b16 %v2562, %v2558
      %v2691 = vpack.c.b16 %v2563, %v2559
      %v2692 = vpack.c.b16 %v2564, %v2560
      %2821 = vmatprep.subr.bf16.mxu0 %v2594
      %2822 = vmatpush1.bf16.msra.mxu0 %v2593
      %2823 = vmatprep.subr.bf16.mxu0 %v2590
      %2824 = vmatpush1.bf16.msra.mxu0 %v2589
      %2825 = vmatprep.subr.bf16.mxu0 %v2586
      %2826 = vmatpush1.bf16.msra.mxu0 %v2585
      %2827 = vmatprep.subr.bf16.mxu0 %v2582
      %2828 = vmatpush1.bf16.msra.mxu0 %v2581
      %2829 = vmatprep.subr.bf16.mxu0 %v2578
      %2830 = vmatpush1.bf16.msra.mxu0 %v2577
      %2831 = vmatprep.subr.bf16.mxu0 %v2574
      %2832 = vmatpush1.bf16.msra.mxu0 %v2573
      %2833 = vmatprep.subr.bf16.mxu0 %v2570
      %2834 = vmatpush1.bf16.msra.mxu0 %v2569
      %2835 = vmatprep.subr.bf16.mxu0 %v2566
      %2836 = vmatpush1.bf16.msra.mxu0 %v2565
      %2837 = vmatprep.subr.bf16.mxu0 %v2626
      %2838 = vmatpush2.bf16.msra.mxu0 %v2625
      %2839 = vmatprep.subr.bf16.mxu0 %v2622
      %2840 = vmatpush2.bf16.msra.mxu0 %v2621
      %2841 = vmatprep.subr.bf16.mxu0 %v2618
      %2842 = vmatpush2.bf16.msra.mxu0 %v2617
      %2843 = vmatprep.subr.bf16.mxu0 %v2614
      %2844 = vmatpush2.bf16.msra.mxu0 %v2613
      %2845 = vmatprep.subr.bf16.mxu0 %v2610
      %2846 = vmatpush2.bf16.msra.mxu0 %v2609
      %2847 = vmatprep.subr.bf16.mxu0 %v2606
      %2848 = vmatpush2.bf16.msra.mxu0 %v2605
      %2849 = vmatprep.subr.bf16.mxu0 %v2602
      %2850 = vmatpush2.bf16.msra.mxu0 %v2601
      %2851 = vmatprep.subr.bf16.mxu0 %v2598
      %2852 = vmatpush2.bf16.msra.mxu0 %v2597
      %2853 = vmatprep.mubr.bf16.mxu0 %v2028
      %2854 = vmatmul.mubr.bf16.gmra.mxu0 %v2027
      %v2855 = vpop.f32.mrf.mxu0
      %v2856 = vadd.f32 %v2164, %v2855
      %v2857 = vpop.f32.mrf.mxu0
      %v2858 = vadd.f32 %v2168, %v2857
      %v2859 = vpop.f32.mrf.mxu0
      %v2860 = vadd.f32 %v2164, %v2859
      %v2861 = vpop.f32.mrf.mxu0
      %v2862 = vadd.f32 %v2168, %v2861
      %2863 = vdwg.mxu0
      %2864 = vmatprep.subr.bf16.mxu0 %v2658
      %2865 = vmatpush1.bf16.msra.mxu0 %v2657
      %2866 = vmatprep.subr.bf16.mxu0 %v2654
      %2867 = vmatpush1.bf16.msra.mxu0 %v2653
      %2868 = vmatprep.subr.bf16.mxu0 %v2650
      %2869 = vmatpush1.bf16.msra.mxu0 %v2649
      %2870 = vmatprep.subr.bf16.mxu0 %v2646
      %2871 = vmatpush1.bf16.msra.mxu0 %v2645
      %2872 = vmatprep.subr.bf16.mxu0 %v2642
      %2873 = vmatpush1.bf16.msra.mxu0 %v2641
      %2874 = vmatprep.subr.bf16.mxu0 %v2638
      %2875 = vmatpush1.bf16.msra.mxu0 %v2637
      %2876 = vmatprep.subr.bf16.mxu0 %v2634
      %2877 = vmatpush1.bf16.msra.mxu0 %v2633
      %2878 = vmatprep.subr.bf16.mxu0 %v2630
      %2879 = vmatpush1.bf16.msra.mxu0 %v2629
      %2880 = vmatprep.subr.bf16.mxu0 %v2690
      %2881 = vmatpush2.bf16.msra.mxu0 %v2689
      %2882 = vmatprep.subr.bf16.mxu0 %v2686
      %2883 = vmatpush2.bf16.msra.mxu0 %v2685
      %2884 = vmatprep.subr.bf16.mxu0 %v2682
      %2885 = vmatpush2.bf16.msra.mxu0 %v2681
      %2886 = vmatprep.subr.bf16.mxu0 %v2678
      %2887 = vmatpush2.bf16.msra.mxu0 %v2677
      %2888 = vmatprep.subr.bf16.mxu0 %v2674
      %2889 = vmatpush2.bf16.msra.mxu0 %v2673
      %2890 = vmatprep.subr.bf16.mxu0 %v2670
      %2891 = vmatpush2.bf16.msra.mxu0 %v2669
      %2892 = vmatprep.subr.bf16.mxu0 %v2666
      %2893 = vmatpush2.bf16.msra.mxu0 %v2665
      %2894 = vmatprep.subr.bf16.mxu0 %v2662
      %2895 = vmatpush2.bf16.msra.mxu0 %v2661
      %2896 = vmatprep.mubr.bf16.mxu0 %v2030
      %2897 = vmatmul.mubr.bf16.gmra.mxu0 %v2029
      %v2898 = vpop.f32.mrf.mxu0
      %v2899 = vadd.f32 %v2856, %v2898
      %v2900 = vpop.f32.mrf.mxu0
      %v2901 = vadd.f32 %v2858, %v2900
      %v2902 = vpop.f32.mrf.mxu0
      %v2903 = vadd.f32 %v2860, %v2902
      %v2904 = vpop.f32.mrf.mxu0
      %v2905 = vadd.f32 %v2862, %v2904
      %2906 = vdwg.mxu0
      %2907 = vmatprep.subr.bf16.mxu0 %v2596
      %2908 = vmatpush1.bf16.msra.mxu0 %v2595
      %2909 = vmatprep.subr.bf16.mxu0 %v2592
      %2910 = vmatpush1.bf16.msra.mxu0 %v2591
      %2911 = vmatprep.subr.bf16.mxu0 %v2588
      %2912 = vmatpush1.bf16.msra.mxu0 %v2587
      %2913 = vmatprep.subr.bf16.mxu0 %v2584
      %2914 = vmatpush1.bf16.msra.mxu0 %v2583
      %2915 = vmatprep.subr.bf16.mxu0 %v2580
      %2916 = vmatpush1.bf16.msra.mxu0 %v2579
      %2917 = vmatprep.subr.bf16.mxu0 %v2576
      %2918 = vmatpush1.bf16.msra.mxu0 %v2575
      %2919 = vmatprep.subr.bf16.mxu0 %v2572
      %2920 = vmatpush1.bf16.msra.mxu0 %v2571
      %2921 = vmatprep.subr.bf16.mxu0 %v2568
      %2922 = vmatpush1.bf16.msra.mxu0 %v2567
      %2923 = vmatprep.subr.bf16.mxu0 %v2628
      %2924 = vmatpush2.bf16.msra.mxu0 %v2627
      %2925 = vmatprep.subr.bf16.mxu0 %v2624
      %2926 = vmatpush2.bf16.msra.mxu0 %v2623
      %2927 = vmatprep.subr.bf16.mxu0 %v2620
      %2928 = vmatpush2.bf16.msra.mxu0 %v2619
      %2929 = vmatprep.subr.bf16.mxu0 %v2616
      %2930 = vmatpush2.bf16.msra.mxu0 %v2615
      %2931 = vmatprep.subr.bf16.mxu0 %v2612
      %2932 = vmatpush2.bf16.msra.mxu0 %v2611
      %2933 = vmatprep.subr.bf16.mxu0 %v2608
      %2934 = vmatpush2.bf16.msra.mxu0 %v2607
      %2935 = vmatprep.subr.bf16.mxu0 %v2604
      %2936 = vmatpush2.bf16.msra.mxu0 %v2603
      %2937 = vmatprep.subr.bf16.mxu0 %v2600
      %2938 = vmatpush2.bf16.msra.mxu0 %v2599
      %2939 = vmatprep.mubr.bf16.mxu0 %v2028
      %2940 = vmatmul.mubr.bf16.gmra.mxu0 %v2027
      %v2941 = vpop.f32.mrf.mxu0
      %v2942 = vadd.f32 %v2172, %v2941
      %v2943 = vpop.f32.mrf.mxu0
      %v2944 = vadd.f32 %v2176, %v2943
      %v2945 = vpop.f32.mrf.mxu0
      %v2946 = vadd.f32 %v2172, %v2945
      %v2947 = vpop.f32.mrf.mxu0
      %v2948 = vadd.f32 %v2176, %v2947
      %2949 = vdwg.mxu0
      %2950 = vmatprep.subr.bf16.mxu0 %v2660
      %2951 = vmatpush1.bf16.msra.mxu0 %v2659
      %2952 = vmatprep.subr.bf16.mxu0 %v2656
      %2953 = vmatpush1.bf16.msra.mxu0 %v2655
      %2954 = vmatprep.subr.bf16.mxu0 %v2652
      %2955 = vmatpush1.bf16.msra.mxu0 %v2651
      %2956 = vmatprep.subr.bf16.mxu0 %v2648
      %2957 = vmatpush1.bf16.msra.mxu0 %v2647
      %2958 = vmatprep.subr.bf16.mxu0 %v2644
      %2959 = vmatpush1.bf16.msra.mxu0 %v2643
      %2960 = vmatprep.subr.bf16.mxu0 %v2640
      %2961 = vmatpush1.bf16.msra.mxu0 %v2639
      %2962 = vmatprep.subr.bf16.mxu0 %v2636
      %2963 = vmatpush1.bf16.msra.mxu0 %v2635
      %2964 = vmatprep.subr.bf16.mxu0 %v2632
      %2965 = vmatpush1.bf16.msra.mxu0 %v2631
      %2966 = vmatprep.subr.bf16.mxu0 %v2692
      %2967 = vmatpush2.bf16.msra.mxu0 %v2691
      %2968 = vmatprep.subr.bf16.mxu0 %v2688
      %2969 = vmatpush2.bf16.msra.mxu0 %v2687
      %2970 = vmatprep.subr.bf16.mxu0 %v2684
      %2971 = vmatpush2.bf16.msra.mxu0 %v2683
      %2972 = vmatprep.subr.bf16.mxu0 %v2680
      %2973 = vmatpush2.bf16.msra.mxu0 %v2679
      %2974 = vmatprep.subr.bf16.mxu0 %v2676
      %2975 = vmatpush2.bf16.msra.mxu0 %v2675
      %2976 = vmatprep.subr.bf16.mxu0 %v2672
      %2977 = vmatpush2.bf16.msra.mxu0 %v2671
      %2978 = vmatprep.subr.bf16.mxu0 %v2668
      %2979 = vmatpush2.bf16.msra.mxu0 %v2667
      %2980 = vmatprep.subr.bf16.mxu0 %v2664
      %2981 = vmatpush2.bf16.msra.mxu0 %v2663
      %2982 = vmatprep.mubr.bf16.mxu0 %v2030
      %2983 = vmatmul.mubr.bf16.gmra.mxu0 %v2029
      %v2984 = vpop.f32.mrf.mxu0
      %v2985 = vadd.f32 %v2942, %v2984
      %v2986 = vpop.f32.mrf.mxu0
      %v2987 = vadd.f32 %v2944, %v2986
      %v2988 = vpop.f32.mrf.mxu0
      %v2989 = vadd.f32 %v2946, %v2988
      %v2990 = vpop.f32.mrf.mxu0
      %v2991 = vadd.f32 %v2948, %v2990
      %2992 = vdwg.mxu0
      %v2993 = vmax.f32 %v2899, 0.0
      %v2994 = vmax.f32 %v2901, 0.0
      %v2995 = vmax.f32 %v2985, 0.0
      %v2996 = vmax.f32 %v2987, 0.0
      %v2997 = vmax.f32 %v2903, 0.0
      %v2998 = vmax.f32 %v2905, 0.0
      %v2999 = vmax.f32 %v2989, 0.0
      %v3000 = vmax.f32 %v2991, 0.0
      %v3001 = vpack.c.bf16 %v2997, %v2993
      %v3002 = vpack.c.bf16 %v2998, %v2994
      %v3003 = vpack.c.bf16 %v2999, %v2995
      %v3004 = vpack.c.bf16 %v3000, %v2996
      %v3005 = vld [vmem:[%s9] sm:$0xf]
      %v3006 = vld [vmem:[%s9 + $0x4] sm:$0xf]
      %v3007 = vld [vmem:[%s9 + $0x8] sm:$0xf]
      %v3008 = vld [vmem:[%s9 + $0xc] sm:$0xf]
      %v3009 = vld [vmem:[%s9 + $0x10] sm:$0xf]
      %v3010 = vld [vmem:[%s9 + $0x14] sm:$0xf]
      %v3011 = vld [vmem:[%s9 + $0x18] sm:$0xf]
      %v3012 = vld [vmem:[%s9 + $0x1c] sm:$0xf]
      %v3013 = vld [vmem:[%s9 + $0x20] sm:$0xf]
      %v3014 = vld [vmem:[%s9 + $0x24] sm:$0xf]
      %v3015 = vld [vmem:[%s9 + $0x28] sm:$0xf]
      %v3016 = vld [vmem:[%s9 + $0x2c] sm:$0xf]
      %v3017 = vld [vmem:[%s9 + $0x30] sm:$0xf]
      %v3018 = vld [vmem:[%s9 + $0x34] sm:$0xf]
      %v3019 = vld [vmem:[%s9 + $0x38] sm:$0xf]
      %v3020 = vld [vmem:[%s9 + $0x3c] sm:$0xf]
      %v3021 = vld [vmem:[%s9 + $0x40] sm:$0xf]
      %v3022 = vld [vmem:[%s9 + $0x44] sm:$0xf]
      %v3023 = vld [vmem:[%s9 + $0x48] sm:$0xf]
      %v3024 = vld [vmem:[%s9 + $0x4c] sm:$0xf]
      %v3025 = vld [vmem:[%s9 + $0x50] sm:$0xf]
      %v3026 = vld [vmem:[%s9 + $0x54] sm:$0xf]
      %v3027 = vld [vmem:[%s9 + $0x58] sm:$0xf]
      %v3028 = vld [vmem:[%s9 + $0x5c] sm:$0xf]
      %v3029 = vld [vmem:[%s9 + $0x60] sm:$0xf]
      %v3030 = vld [vmem:[%s9 + $0x64] sm:$0xf]
      %v3031 = vld [vmem:[%s9 + $0x68] sm:$0xf]
      %v3032 = vld [vmem:[%s9 + $0x6c] sm:$0xf]
      %v3033 = vld [vmem:[%s9 + $0x70] sm:$0xf]
      %v3034 = vld [vmem:[%s9 + $0x74] sm:$0xf]
      %v3035 = vld [vmem:[%s9 + $0x78] sm:$0xf]
      %v3036 = vld [vmem:[%s9 + $0x7c] sm:$0xf]
      %v3037 = vld [vmem:[%s9 + $0x80] sm:$0xf]
      %v3038 = vld [vmem:[%s9 + $0x84] sm:$0xf]
      %v3039 = vld [vmem:[%s9 + $0x88] sm:$0xf]
      %v3040 = vld [vmem:[%s9 + $0x8c] sm:$0xf]
      %v3041 = vld [vmem:[%s9 + $0x90] sm:$0xf]
      %v3042 = vld [vmem:[%s9 + $0x94] sm:$0xf]
      %v3043 = vld [vmem:[%s9 + $0x98] sm:$0xf]
      %v3044 = vld [vmem:[%s9 + $0x9c] sm:$0xf]
      %v3045 = vld [vmem:[%s9 + $0xa0] sm:$0xf]
      %v3046 = vld [vmem:[%s9 + $0xa4] sm:$0xf]
      %v3047 = vld [vmem:[%s9 + $0xa8] sm:$0xf]
      %v3048 = vld [vmem:[%s9 + $0xac] sm:$0xf]
      %v3049 = vld [vmem:[%s9 + $0xb0] sm:$0xf]
      %v3050 = vld [vmem:[%s9 + $0xb4] sm:$0xf]
      %v3051 = vld [vmem:[%s9 + $0xb8] sm:$0xf]
      %v3052 = vld [vmem:[%s9 + $0xbc] sm:$0xf]
      %v3053 = vld [vmem:[%s9 + $0xc0] sm:$0xf]
      %v3054 = vld [vmem:[%s9 + $0xc4] sm:$0xf]
      %v3055 = vld [vmem:[%s9 + $0xc8] sm:$0xf]
      %v3056 = vld [vmem:[%s9 + $0xcc] sm:$0xf]
      %v3057 = vld [vmem:[%s9 + $0xd0] sm:$0xf]
      %v3058 = vld [vmem:[%s9 + $0xd4] sm:$0xf]
      %v3059 = vld [vmem:[%s9 + $0xd8] sm:$0xf]
      %v3060 = vld [vmem:[%s9 + $0xdc] sm:$0xf]
      %v3061 = vld [vmem:[%s9 + $0xe0] sm:$0xf]
      %v3062 = vld [vmem:[%s9 + $0xe4] sm:$0xf]
      %v3063 = vld [vmem:[%s9 + $0xe8] sm:$0xf]
      %v3064 = vld [vmem:[%s9 + $0xec] sm:$0xf]
      %v3065 = vld [vmem:[%s9 + $0xf0] sm:$0xf]
      %v3066 = vld [vmem:[%s9 + $0xf4] sm:$0xf]
      %v3067 = vld [vmem:[%s9 + $0xf8] sm:$0xf]
      %v3068 = vld [vmem:[%s9 + $0xfc] sm:$0xf]
      %v3069 = vld [vmem:[%s10] sm:$0x1]
      %v3071 = vlaneseq
      %v3072 = vshrl.u32 %v3071, 7
      %v3073 = vsub.s32 0, %v3072
      %v3074 = vrot.slane %v3069, %v3073
      %v3140 = vunpack.c.l.b16 %v3005
      %v3141 = vunpack.c.l.b16 %v3006
      %v3142 = vunpack.c.l.b16 %v3007
      %v3143 = vunpack.c.l.b16 %v3008
      %v3144 = vunpack.c.l.b16 %v3009
      %v3145 = vunpack.c.l.b16 %v3010
      %v3146 = vunpack.c.l.b16 %v3011
      %v3147 = vunpack.c.l.b16 %v3012
      %v3148 = vunpack.c.l.b16 %v3013
      %v3149 = vunpack.c.l.b16 %v3014
      %v3150 = vunpack.c.l.b16 %v3015
      %v3151 = vunpack.c.l.b16 %v3016
      %v3152 = vunpack.c.l.b16 %v3017
      %v3153 = vunpack.c.l.b16 %v3018
      %v3154 = vunpack.c.l.b16 %v3019
      %v3155 = vunpack.c.l.b16 %v3020
      %v3156 = vunpack.c.l.b16 %v3021
      %v3157 = vunpack.c.l.b16 %v3022
      %v3158 = vunpack.c.l.b16 %v3023
      %v3159 = vunpack.c.l.b16 %v3024
      %v3160 = vunpack.c.l.b16 %v3025
      %v3161 = vunpack.c.l.b16 %v3026
      %v3162 = vunpack.c.l.b16 %v3027
      %v3163 = vunpack.c.l.b16 %v3028
      %v3164 = vunpack.c.l.b16 %v3029
      %v3165 = vunpack.c.l.b16 %v3030
      %v3166 = vunpack.c.l.b16 %v3031
      %v3167 = vunpack.c.l.b16 %v3032
      %v3168 = vunpack.c.l.b16 %v3033
      %v3169 = vunpack.c.l.b16 %v3034
      %v3170 = vunpack.c.l.b16 %v3035
      %v3171 = vunpack.c.l.b16 %v3036
      %v3172 = vunpack.c.l.b16 %v3037
      %v3173 = vunpack.c.l.b16 %v3038
      %v3174 = vunpack.c.l.b16 %v3039
      %v3175 = vunpack.c.l.b16 %v3040
      %v3176 = vunpack.c.l.b16 %v3041
      %v3177 = vunpack.c.l.b16 %v3042
      %v3178 = vunpack.c.l.b16 %v3043
      %v3179 = vunpack.c.l.b16 %v3044
      %v3180 = vunpack.c.l.b16 %v3045
      %v3181 = vunpack.c.l.b16 %v3046
      %v3182 = vunpack.c.l.b16 %v3047
      %v3183 = vunpack.c.l.b16 %v3048
      %v3184 = vunpack.c.l.b16 %v3049
      %v3185 = vunpack.c.l.b16 %v3050
      %v3186 = vunpack.c.l.b16 %v3051
      %v3187 = vunpack.c.l.b16 %v3052
      %v3188 = vunpack.c.l.b16 %v3053
      %v3189 = vunpack.c.l.b16 %v3054
      %v3190 = vunpack.c.l.b16 %v3055
      %v3191 = vunpack.c.l.b16 %v3056
      %v3192 = vunpack.c.l.b16 %v3057
      %v3193 = vunpack.c.l.b16 %v3058
      %v3194 = vunpack.c.l.b16 %v3059
      %v3195 = vunpack.c.l.b16 %v3060
      %v3196 = vunpack.c.l.b16 %v3061
      %v3197 = vunpack.c.l.b16 %v3062
      %v3198 = vunpack.c.l.b16 %v3063
      %v3199 = vunpack.c.l.b16 %v3064
      %v3200 = vunpack.c.l.b16 %v3065
      %v3201 = vunpack.c.l.b16 %v3066
      %v3202 = vunpack.c.l.b16 %v3067
      %v3203 = vunpack.c.l.b16 %v3068
      %v3204 = vpack.c.b16 %v3141, %v3140
      %v3205 = vpack.c.b16 %v3143, %v3142
      %v3206 = vpack.c.b16 %v3145, %v3144
      %v3207 = vpack.c.b16 %v3147, %v3146
      %v3208 = vpack.c.b16 %v3149, %v3148
      %v3209 = vpack.c.b16 %v3151, %v3150
      %v3210 = vpack.c.b16 %v3153, %v3152
      %v3211 = vpack.c.b16 %v3155, %v3154
      %v3212 = vpack.c.b16 %v3157, %v3156
      %v3213 = vpack.c.b16 %v3159, %v3158
      %v3214 = vpack.c.b16 %v3161, %v3160
      %v3215 = vpack.c.b16 %v3163, %v3162
      %v3216 = vpack.c.b16 %v3165, %v3164
      %v3217 = vpack.c.b16 %v3167, %v3166
      %v3218 = vpack.c.b16 %v3169, %v3168
      %v3219 = vpack.c.b16 %v3171, %v3170
      %v3220 = vpack.c.b16 %v3173, %v3172
      %v3221 = vpack.c.b16 %v3175, %v3174
      %v3222 = vpack.c.b16 %v3177, %v3176
      %v3223 = vpack.c.b16 %v3179, %v3178
      %v3224 = vpack.c.b16 %v3181, %v3180
      %v3225 = vpack.c.b16 %v3183, %v3182
      %v3226 = vpack.c.b16 %v3185, %v3184
      %v3227 = vpack.c.b16 %v3187, %v3186
      %v3228 = vpack.c.b16 %v3189, %v3188
      %v3229 = vpack.c.b16 %v3191, %v3190
      %v3230 = vpack.c.b16 %v3193, %v3192
      %v3231 = vpack.c.b16 %v3195, %v3194
      %v3232 = vpack.c.b16 %v3197, %v3196
      %v3233 = vpack.c.b16 %v3199, %v3198
      %v3234 = vpack.c.b16 %v3201, %v3200
      %v3235 = vpack.c.b16 %v3203, %v3202
      %3268 = vmatprep.subr.bf16.mxu0 0
      %3269 = vmatpush1.bf16.msra.mxu0 %v3211
      %3270 = vmatprep.subr.bf16.mxu0 0
      %3271 = vmatpush1.bf16.msra.mxu0 %v3210
      %3272 = vmatprep.subr.bf16.mxu0 0
      %3273 = vmatpush1.bf16.msra.mxu0 %v3209
      %3274 = vmatprep.subr.bf16.mxu0 0
      %3275 = vmatpush1.bf16.msra.mxu0 %v3208
      %3276 = vmatprep.subr.bf16.mxu0 0
      %3277 = vmatpush1.bf16.msra.mxu0 %v3207
      %3278 = vmatprep.subr.bf16.mxu0 0
      %3279 = vmatpush1.bf16.msra.mxu0 %v3206
      %3280 = vmatprep.subr.bf16.mxu0 0
      %3281 = vmatpush1.bf16.msra.mxu0 %v3205
      %3282 = vmatprep.subr.bf16.mxu0 0
      %3283 = vmatpush1.bf16.msra.mxu0 %v3204
      %3284 = vmatprep.subr.bf16.mxu0 0
      %3285 = vmatpush2.bf16.msra.mxu0 %v3219
      %3286 = vmatprep.subr.bf16.mxu0 0
      %3287 = vmatpush2.bf16.msra.mxu0 %v3218
      %3288 = vmatprep.subr.bf16.mxu0 0
      %3289 = vmatpush2.bf16.msra.mxu0 %v3217
      %3290 = vmatprep.subr.bf16.mxu0 0
      %3291 = vmatpush2.bf16.msra.mxu0 %v3216
      %3292 = vmatprep.subr.bf16.mxu0 0
      %3293 = vmatpush2.bf16.msra.mxu0 %v3215
      %3294 = vmatprep.subr.bf16.mxu0 0
      %3295 = vmatpush2.bf16.msra.mxu0 %v3214
      %3296 = vmatprep.subr.bf16.mxu0 0
      %3297 = vmatpush2.bf16.msra.mxu0 %v3213
      %3298 = vmatprep.subr.bf16.mxu0 0
      %3299 = vmatpush2.bf16.msra.mxu0 %v3212
      %3300 = vmatprep.mubr.bf16.mxu0 %v3002
      %3301 = vmatmul.mubr.bf16.gmra.mxu0 %v3001
      %v3302 = vpop.f32.mrf.mxu0
      %v3303 = vadd.f32 %v3074, %v3302
      %v3304 = vpop.f32.mrf.mxu0
      %v3305 = vpop.f32.mrf.mxu0
      %v3306 = vadd.f32 %v3074, %v3305
      %v3307 = vpop.f32.mrf.mxu0
      %3308 = vdwg.mxu0
      %3309 = vmatprep.subr.bf16.mxu0 0
      %3310 = vmatpush1.bf16.msra.mxu0 %v3227
      %3311 = vmatprep.subr.bf16.mxu0 0
      %3312 = vmatpush1.bf16.msra.mxu0 %v3226
      %3313 = vmatprep.subr.bf16.mxu0 0
      %3314 = vmatpush1.bf16.msra.mxu0 %v3225
      %3315 = vmatprep.subr.bf16.mxu0 0
      %3316 = vmatpush1.bf16.msra.mxu0 %v3224
      %3317 = vmatprep.subr.bf16.mxu0 0
      %3318 = vmatpush1.bf16.msra.mxu0 %v3223
      %3319 = vmatprep.subr.bf16.mxu0 0
      %3320 = vmatpush1.bf16.msra.mxu0 %v3222
      %3321 = vmatprep.subr.bf16.mxu0 0
      %3322 = vmatpush1.bf16.msra.mxu0 %v3221
      %3323 = vmatprep.subr.bf16.mxu0 0
      %3324 = vmatpush1.bf16.msra.mxu0 %v3220
      %3325 = vmatprep.subr.bf16.mxu0 0
      %3326 = vmatpush2.bf16.msra.mxu0 %v3235
      %3327 = vmatprep.subr.bf16.mxu0 0
      %3328 = vmatpush2.bf16.msra.mxu0 %v3234
      %3329 = vmatprep.subr.bf16.mxu0 0
      %3330 = vmatpush2.bf16.msra.mxu0 %v3233
      %3331 = vmatprep.subr.bf16.mxu0 0
      %3332 = vmatpush2.bf16.msra.mxu0 %v3232
      %3333 = vmatprep.subr.bf16.mxu0 0
      %3334 = vmatpush2.bf16.msra.mxu0 %v3231
      %3335 = vmatprep.subr.bf16.mxu0 0
      %3336 = vmatpush2.bf16.msra.mxu0 %v3230
      %3337 = vmatprep.subr.bf16.mxu0 0
      %3338 = vmatpush2.bf16.msra.mxu0 %v3229
      %3339 = vmatprep.subr.bf16.mxu0 0
      %3340 = vmatpush2.bf16.msra.mxu0 %v3228
      %3341 = vmatprep.mubr.bf16.mxu0 %v3004
      %3342 = vmatmul.mubr.bf16.gmra.mxu0 %v3003
      %v3343 = vpop.f32.mrf.mxu0
      %v3344 = vadd.f32 %v3303, %v3343
      %v3345 = vpop.f32.mrf.mxu0
      %v3346 = vpop.f32.mrf.mxu0
      %v3347 = vadd.f32 %v3306, %v3346
      %v3348 = vpop.f32.mrf.mxu0
      %3349 = vdwg.mxu0
      %v3350 = vadd.f32 %v1835, %v3344
      %v3351 = vadd.f32 %v1838, %v3347
      %vm3352 = vcmask 64512
      %3353 = vst.msk [vmem:[%s433] sm:$0xff] %vm3352, %v3350
      %3354 = vst.msk [vmem:[%s433 + $0x8] sm:$0xff] %vm3352, %v3351
      %s3355 = smul.u32 2, %s26
      %p3356 = scmp.lt.s32.totalorder %s27, 1
      %s3357 = scalar_select %p3356, %s27, 1
      %p3358 = scmp.lt.s32.totalorder %s3355, 1
      %s3359 = scalar_select %p3358, %s3355, 1
      %s3360 = smul.addr %s3357, 2
      %s3361 = sadd.s32 %s3359, %s3360
      %s3362 = smul.addr %s3361, 8
      %s3363 = scalar_lea.vmem %s11, %s3362
      // Predicated region
      $region65: #{folding_net_ndim_forward.1} parent=63 // pred_check
        %p3364 = pneg %p295
      $region66: #{folding_net_ndim_forward.1} parent=63 // pred_check_branch
        %3366 = sbr.rel (%p3364) target = $region68
      $region67: #{folding_net_ndim_forward.1} parent=63 // pred_region
        %s3367 = smul.u32 2, %s26
      $region68: #{folding_net_ndim_forward.1} parent=63 // pred_fallthru
        _
    $region64: #{folding_net_ndim_forward.1} parent=5 // pred_fallthru
      _
    %p3368 = scmp.le.s32.totalorder 2, %s17
    // Predicated region
    $region69: #{folding_net_ndim_forward.1} parent=5 // pred_check
      %p3369 = pneg %p3368
    $region70: #{folding_net_ndim_forward.1} parent=5 // pred_check_branch
      %3371 = sbr.rel (%p3369) target = $region72
    $region71: #{folding_net_ndim_forward.1} parent=5 // pred_region
      %s3372 = ssub.s32 %s17, 2
      // Predicated region
      $region73: #{folding_net_ndim_forward.1} parent=71 // pred_check
        %p3373 = pneg %p301
      $region74: #{folding_net_ndim_forward.1} parent=71 // pred_check_branch
        %3375 = sbr.rel (%p3373) target = $region76
      $region75: #{folding_net_ndim_forward.1} parent=71 // pred_region
        %s3376 = smul.u32 2, %s28
        %p3377 = scmp.lt.s32.totalorder %s29, 1
        %s3378 = scalar_select %p3377, %s29, 1
        %p3379 = scmp.lt.s32.totalorder %s3376, 1
        %s3380 = scalar_select %p3379, %s3376, 1
        %s3381 = smul.addr %s3378, 2
        %s3382 = sadd.s32 %s3380, %s3381
        %s3383 = smul.addr %s3382, 8
        %s3384 = scalar_lea.vmem %s11, %s3383
      $region76: #{folding_net_ndim_forward.1} parent=71 // pred_fallthru
        _
    $region72: #{folding_net_ndim_forward.1} parent=5 // pred_fallthru
      _
  $region6: #{folding_net_ndim_forward.1} parent=0 // loop_footer
    %s21 = sadd.s32 1, %s17
  $region7: #{folding_net_ndim_forward.1} parent=0 // loop_footer_branch
    %16 = sbr.rel target = $region3
  $region8: #{folding_net_ndim_forward.1} parent=0 // loop_exit
    _

</llo_original>
